<compile_context>
chip_gen: v7x
topology: tpu7x:2x2x1
jax: 0.10.0
libtpu: 0.0.40
codegen_flags: <defaults>
</compile_context>

<pallas_src>
import functools

import jax
import jax.numpy as jnp
from jax import lax
from jax.experimental import pallas as pl
from jax.experimental.pallas import tpu as pltpu


def _round_up(x, m):
    return ((x + m - 1) // m) * m


def class_embedding_kernel(c_ref, w1_ref, b1_ref, w2_ref, b2_ref, out_ref,
                           *, silu_in_bf16):
    c = c_ref[...]                               # [tile_b, 1] int32
    tile_b = c.shape[0]
    padded_classes = w1_ref.shape[0]             # multiple of 128

    # One-hot "gather" of the fused (emb_w @ w1) table.  The classifier-free
    # guidance null class (c <= 0 -> zero embedding) is folded into the
    # compare, and the one-hot is bf16 (values exactly 0/1) so the MXU runs a
    # single lane-dense bf16 pass with f32 accumulation.
    class_ids = lax.broadcasted_iota(jnp.int32, (tile_b, padded_classes), 1)
    onehot = jnp.logical_and(c == class_ids, c > 0).astype(jnp.bfloat16)

    # h = emb @ w1 + b1  ==  onehot @ (emb_w @ w1) + b1     [tile_b, hidden]
    h = jnp.dot(onehot, w1_ref[...],
                preferred_element_type=jnp.float32) + b1_ref[...]

    # SiLU.  bf16 on v6e/v7x (bf16 VPU/EUP; the value is cast to bf16 for the
    # second matmul anyway), f32 path on v5e (no bf16 vector/EUP units).
    if silu_in_bf16:
        hb = h.astype(jnp.bfloat16)
        hb = hb * jax.nn.sigmoid(hb)
    else:
        hb = (h * jax.nn.sigmoid(h)).astype(jnp.bfloat16)

    out = jnp.dot(hb, w2_ref[...],
                  preferred_element_type=jnp.float32) + b2_ref[...]  # [tile_b, dim]
    out_ref[...] = out.astype(out_ref.dtype)


def class_embedding_forward(c, emb_w, w1, b1, w2, b2, *, tile_b=512,
                            out_dtype=jnp.float32, silu_in_bf16=None):
    """c: [b] int labels. Returns [b, dim] in `out_dtype` (default float32)."""
    b = c.shape[0]
    num_classes, dim = emb_w.shape
    hidden = w1.shape[1]

    # ---- generation-dependent knobs --------------------------------------
    try:
        kind = jax.devices()[0].device_kind.lower()
    except Exception:
        kind = ""
    is_v7 = "7" in kind
    is_old_gen = any(t in kind for t in ("v2", "v3", "v4", "v5"))
    if silu_in_bf16 is None:
        silu_in_bf16 = not is_old_gen            # bf16 SiLU on v6e / v7x only
    vmem_cap = (48 << 20) if is_v7 else (100 << 20)

    # ---- batch tiling ------------------------------------------------------
    # Round the tile to a sublane multiple (lowering requirement) and keep at
    # least 2 grid steps so the "parallel" axis can use both TCs on v7x.
    tile_b = max(8, min(int(tile_b), b))
    tile_b = _round_up(tile_b, 8)
    if tile_b >= b and b > 8:
        tile_b = _round_up(pl.cdiv(b, 2), 8)
    padded_b = pl.cdiv(b, tile_b) * tile_b
    grid = (padded_b // tile_b,)

    c2d = c.reshape(b, 1).astype(jnp.int32)
    if padded_b != b:
        # Pad with the null class (0): padded rows are harmless, sliced off.
        c2d = jnp.pad(c2d, ((0, padded_b - b), (0, 0)))

    # ---- host-side weight prep --------------------------------------------
    # Fold the embedding table into the first Linear (f32 matmul, one bf16
    # cast) and zero-pad the class axis to a multiple of 128 so the one-hot
    # operand is lane-dense.
    padded_classes = _round_up(max(num_classes, 128), 128)
    fused_w1 = jnp.matmul(emb_w.astype(jnp.float32), w1.astype(jnp.float32))
    fused_w1 = jnp.pad(fused_w1, ((0, padded_classes - num_classes), (0, 0)))
    fused_w1 = fused_w1.astype(jnp.bfloat16)               # [padded_classes, hidden]
    w2_bf16 = w2.astype(jnp.bfloat16)                      # [hidden, dim]
    b1_2d = b1.reshape(1, hidden).astype(jnp.float32)
    b2_2d = b2.reshape(1, dim).astype(jnp.float32)

    # ---- VMEM budget --------------------------------------------------------
    # Weights are single-buffered (untiled memory_space=VMEM operands); the
    # c / out tiles are double-buffered by the BlockSpec pipeline.
    out_itemsize = jnp.dtype(out_dtype).itemsize
    weight_bytes = (fused_w1.size * 2 + w2_bf16.size * 2
                    + b1_2d.size * 4 + b2_2d.size * 4)
    tile_bytes = 2 * (tile_b * 4 + tile_b * dim * out_itemsize)
    act_bytes = (tile_b * padded_classes * 2 + tile_b * hidden * 4
                 + tile_b * dim * 4)
    vmem_limit = int(1.5 * (weight_bytes + tile_bytes + act_bytes)) + (4 << 20)
    vmem_limit = min(max(vmem_limit, 16 << 20), vmem_cap)

    kernel = functools.partial(class_embedding_kernel, silu_in_bf16=silu_in_bf16)
    # Whole-array VMEM placement: one resident copy, no per-step re-DMA and no
    # double buffer (the intent of Buffered(1) for constant-index operands).
    resident = pl.BlockSpec(memory_space=pltpu.MemorySpace.VMEM)

    out = pl.pallas_call(
        kernel,
        out_shape=jax.ShapeDtypeStruct((padded_b, dim), out_dtype),
        grid=grid,
        in_specs=[
            pl.BlockSpec((tile_b, 1), lambda i: (i, 0)),   # c (pipelined over batch)
            resident,                                      # fused (emb_w @ w1), bf16
            resident,                                      # b1, f32
            resident,                                      # w2, bf16
            resident,                                      # b2, f32
        ],
        out_specs=pl.BlockSpec((tile_b, dim), lambda i: (i, 0)),
        compiler_params=pltpu.CompilerParams(
            dimension_semantics=("parallel",),   # batch tiles shard across TCs (v7x)
            vmem_limit_bytes=vmem_limit,
        ),
    )(c2d, fused_w1, b1_2d, w2_bf16, b2_2d)
    return out[:b]


def init_params(key, dim, num_classes=10, mlp_mult=4):
    hidden = dim * mlp_mult
    k_emb, k_w1, k_b1, k_w2, k_b2 = jax.random.split(key, 5)
    # nn.Embedding weight with normal std=0.02 (as in the module's __init__)
    emb_w = 0.02 * jax.random.normal(k_emb, (num_classes, dim), jnp.float32)
    # nn.Linear default init: U(-1/sqrt(fan_in), 1/sqrt(fan_in))
    lim1 = 1.0 / (dim ** 0.5)
    w1 = jax.random.uniform(k_w1, (dim, hidden), jnp.float32, -lim1, lim1)
    b1 = jax.random.uniform(k_b1, (hidden,), jnp.float32, -lim1, lim1)
    lim2 = 1.0 / (hidden ** 0.5)
    w2 = jax.random.uniform(k_w2, (hidden, dim), jnp.float32, -lim2, lim2)
    b2 = jax.random.uniform(k_b2, (dim,), jnp.float32, -lim2, lim2)
    return emb_w, w1, b1, w2, b2


def reference_forward(c, emb_w, w1, b1, w2, b2):
    """Plain-JAX f32 reference matching the PyTorch forward."""
    mask = (c > 0)
    idx = jnp.where(mask, c, 0).astype(jnp.int32)
    emb = emb_w[idx] * mask[:, None].astype(jnp.float32)
    h = emb @ w1 + b1
    h = h * jax.nn.sigmoid(h)
    return h @ w2 + b2


if __name__ == "__main__":
    key = jax.random.PRNGKey(0)
    dim, num_classes, mlp_mult = 128, 10, 4
    batch = 200                      # non-multiple of 8: exercises padding + 2-step grid

    k_params, k_c = jax.random.split(key)
    emb_w, w1, b1, w2, b2 = init_params(k_params, dim, num_classes, mlp_mult)
    # class labels in [0, num_classes); 0 means "drop" (null class -> zero emb)
    c = jax.random.randint(k_c, (batch,), 0, num_classes, dtype=jnp.int32)

    out = class_embedding_forward(c, emb_w, w1, b1, w2, b2)
    out = jax.block_until_ready(out)

    ref = reference_forward(c, emb_w, w1, b1, w2, b2)
    assert out.shape == (batch, dim) and out.dtype == jnp.float32
    # bf16 MXU inputs (and bf16 SiLU on v6e/v7x) with f32 accumulation:
    # compare against the f32 reference with a correspondingly loose tolerance.
    assert jnp.allclose(out, ref, atol=1e-2, rtol=1e-2), float(
        jnp.max(jnp.abs(out - ref)))

    print("KERNEL_OK")
</pallas_src>

<mosaic_0001>
module attributes {stable_mosaic.version = 11 : i64} {
  func.func @class_embedding_kernel(%arg0: i32, %arg1: memref<104x1xi32, #tpu.memory_space<vmem>>, %arg2: memref<128x512xbf16, #tpu.memory_space<vmem>>, %arg3: memref<1x512xf32, #tpu.memory_space<vmem>>, %arg4: memref<512x128xbf16, #tpu.memory_space<vmem>>, %arg5: memref<1x128xf32, #tpu.memory_space<vmem>>, %arg6: memref<104x128xf32, #tpu.memory_space<vmem>>) attributes {dimension_semantics = [#tpu.dimension_semantics<parallel>], iteration_bounds = array<i64: 2>, scalar_prefetch = 0 : i64, scratch_operands = 0 : i64, tpu.core_type = #tpu.core_type<tc>, window_params = [{transform_indices = @transform_0, window_bounds = array<i64: 104, 1>}, {pipeline_mode = #tpu.pipeline_mode<synchronous>, transform_indices = @transform_1, window_bounds = array<i64: 128, 512>}, {pipeline_mode = #tpu.pipeline_mode<synchronous>, transform_indices = @transform_2, window_bounds = array<i64: 1, 512>}, {pipeline_mode = #tpu.pipeline_mode<synchronous>, transform_indices = @transform_3, window_bounds = array<i64: 512, 128>}, {pipeline_mode = #tpu.pipeline_mode<synchronous>, transform_indices = @transform_4, window_bounds = array<i64: 1, 128>}, {transform_indices = @transform_5, window_bounds = array<i64: 104, 128>}]} {
    %c0 = arith.constant 0 : index
    %c0_0 = arith.constant 0 : index
    %0 = vector.load %arg1[%c0, %c0_0] : memref<104x1xi32, #tpu.memory_space<vmem>>, vector<104x1xi32>
    %1 = tpu.iota {dimensions = array<i32: 1>} : vector<104x128xi32>
    %2 = vector.broadcast %0 : vector<104x1xi32> to vector<104x128xi32>
    %3 = arith.cmpi eq, %2, %1 : vector<104x128xi32>
    %c0_i32 = arith.constant 0 : i32
    %4 = vector.broadcast %c0_i32 : i32 to vector<104x1xi32>
    %5 = arith.cmpi sgt, %0, %4 : vector<104x1xi32>
    %6 = vector.broadcast %5 : vector<104x1xi1> to vector<104x128xi1>
    %7 = arith.andi %3, %6 : vector<104x128xi1>
    %8 = arith.extui %7 : vector<104x128xi1> to vector<104x128xi32>
    %9 = arith.sitofp %8 : vector<104x128xi32> to vector<104x128xf32>
    %10 = arith.truncf %9 : vector<104x128xf32> to vector<104x128xbf16>
    %c0_1 = arith.constant 0 : index
    %c0_2 = arith.constant 0 : index
    %11 = vector.load %arg2[%c0_1, %c0_2] : memref<128x512xbf16, #tpu.memory_space<vmem>>, vector<128x512xbf16>
    %cst = arith.constant dense<0.000000e+00> : vector<104x512xf32>
    %12 = tpu.matmul %10, %11, %cst {dimension_numbers = #tpu.dot_dimension_numbers<[1], [0], [0], [1], [0, 0, 1, 1], [], []>} : vector<104x128xbf16>, vector<128x512xbf16>, vector<104x512xf32> -> vector<104x512xf32>
    %c0_3 = arith.constant 0 : index
    %c0_4 = arith.constant 0 : index
    %13 = vector.load %arg3[%c0_3, %c0_4] : memref<1x512xf32, #tpu.memory_space<vmem>>, vector<1x512xf32>
    %14 = vector.broadcast %13 : vector<1x512xf32> to vector<104x512xf32>
    %15 = arith.addf %12, %14 : vector<104x512xf32>
    %16 = arith.truncf %15 : vector<104x512xf32> to vector<104x512xbf16>
    %17 = arith.negf %16 : vector<104x512xbf16>
    %18 = math.exp %17 : vector<104x512xbf16>
    %cst_5 = arith.constant 1.000000e+00 : bf16
    %19 = vector.broadcast %cst_5 : bf16 to vector<104x512xbf16>
    %20 = arith.addf %19, %18 : vector<104x512xbf16>
    %21 = arith.divf %19, %20 : vector<104x512xbf16>
    %22 = arith.mulf %16, %21 : vector<104x512xbf16>
    %c0_6 = arith.constant 0 : index
    %c0_7 = arith.constant 0 : index
    %23 = vector.load %arg4[%c0_6, %c0_7] : memref<512x128xbf16, #tpu.memory_space<vmem>>, vector<512x128xbf16>
    %cst_8 = arith.constant dense<0.000000e+00> : vector<104x128xf32>
    %24 = tpu.matmul %22, %23, %cst_8 {dimension_numbers = #tpu.dot_dimension_numbers<[1], [0], [0], [1], [0, 0, 1, 1], [], []>} : vector<104x512xbf16>, vector<512x128xbf16>, vector<104x128xf32> -> vector<104x128xf32>
    %c0_9 = arith.constant 0 : index
    %c0_10 = arith.constant 0 : index
    %25 = vector.load %arg5[%c0_9, %c0_10] : memref<1x128xf32, #tpu.memory_space<vmem>>, vector<1x128xf32>
    %26 = vector.broadcast %25 : vector<1x128xf32> to vector<104x128xf32>
    %27 = arith.addf %24, %26 : vector<104x128xf32>
    %c0_11 = arith.constant 0 : index
    %c0_12 = arith.constant 0 : index
    %28 = vector.load %arg6[%c0_11, %c0_12] : memref<104x128xf32, #tpu.memory_space<vmem>>, vector<104x128xf32>
    tpu.vector_store %arg6[%c0_11, %c0_12], %27 {strides = array<i32>} : memref<104x128xf32, #tpu.memory_space<vmem>>, vector<104x128xf32>,
    return
  }
  func.func @transform_0(%arg0: i32) -> (i32, i32) {
    %c0_i32 = arith.constant 0 : i32
    %c0_i32_0 = arith.constant 0 : i32
    return %arg0, %c0_i32 : i32, i32
  }
  func.func @transform_1(%arg0: i32) -> (i32, i32) {
    %c0_i32 = arith.constant 0 : i32
    %c0_i32_0 = arith.constant 0 : i32
    %c0_i32_1 = arith.constant 0 : i32
    return %c0_i32, %c0_i32_0 : i32, i32
  }
  func.func @transform_2(%arg0: i32) -> (i32, i32) {
    %c0_i32 = arith.constant 0 : i32
    %c0_i32_0 = arith.constant 0 : i32
    %c0_i32_1 = arith.constant 0 : i32
    return %c0_i32, %c0_i32_0 : i32, i32
  }
  func.func @transform_3(%arg0: i32) -> (i32, i32) {
    %c0_i32 = arith.constant 0 : i32
    %c0_i32_0 = arith.constant 0 : i32
    %c0_i32_1 = arith.constant 0 : i32
    return %c0_i32, %c0_i32_0 : i32, i32
  }
  func.func @transform_4(%arg0: i32) -> (i32, i32) {
    %c0_i32 = arith.constant 0 : i32
    %c0_i32_0 = arith.constant 0 : i32
    %c0_i32_1 = arith.constant 0 : i32
    return %c0_i32, %c0_i32_0 : i32, i32
  }
  func.func @transform_5(%arg0: i32) -> (i32, i32) {
    %c0_i32 = arith.constant 0 : i32
    %c0_i32_0 = arith.constant 0 : i32
    return %arg0, %c0_i32 : i32, i32
  }
}

</mosaic_0001>

<llo_original>
// kernel: tpu_custom_call.1
$region0: #{tpu_custom_call.1}
  #allocation0 [shape = 'u32[]', space=smem, size = 0x4, offset = 0x4, fixed_abs, tag = 'smem constant byte address 0x4 - core index']
  #allocation1 [shape = 'u32[144,128]{1,0:T(1,128)}', space=vmem, size = 0x12000, scoped, tag = 'internal scratch']
  %s0 = inlined_call_operand.vmem [shape: s32[208,1], index: 0, kind: input, shape index: {}]
  %s1 = inlined_call_operand.hbm [shape: bf16[128,512], index: 1, kind: input, shape index: {}]
  %s2 = inlined_call_operand.vmem [shape: f32[1,512], index: 2, kind: input, shape index: {}]
  %s3 = inlined_call_operand.hbm [shape: bf16[512,128], index: 3, kind: input, shape index: {}]
  %s4 = inlined_call_operand.vmem [shape: f32[1,128], index: 4, kind: input, shape index: {}]
  %s5 = inlined_call_operand.hbm [shape: f32[208,128], index: 5, kind: output, shape index: {}]
  %s6 = sld [smem:[#allocation0]]
  $region61: #{tpu_custom_call.1} parent=0
    _
  %s8 = ssub.s32 1, %s6
  %s9 = scalar_select 0, %s8, %s6
  $region1: #{tpu_custom_call.1} parent=0
    #allocation2 [shape = 'u8[131072]{0}', space=vmem, size = 0x20000, scoped, tag = 'input window, operand 1, single buffered']
    #allocation3 [shape = 's32[2]{0}', space=sflag, size = 0x8, scoped, tag = 'scoped memory for tpu_custom_call.1']
    #allocation4 [shape = 's32[2]{0}', space=sflag, size = 0x8, scoped, tag = 'scoped memory for tpu_custom_call.1']
    #allocation5 [shape = 'u8[131072]{0}', space=vmem, size = 0x20000, scoped, tag = 'input window, operand 3, single buffered']
    #allocation6 [shape = 's32[1]{0}', space=sflag, size = 0x4, scoped, tag = 'scoped memory for tpu_custom_call.1']
    #allocation7 [shape = 'u8[106496]{0}', space=vmem, size = 0x1a000, scoped, tag = 'output window, operand 0']
    %10 = vsyncpa [#allocation3], 0
    %11 = vsyncpa [#allocation6], 0
    %12 = vsyncpa [#allocation4], 0
    %s13 = scalar_lea.sflag [#allocation4], 1
    %14 = vsyncpa %s13, 0
    loop: start=0, step=1, limit=4
    $region2: #{tpu_custom_call.1} parent=1 // loop_pre_header
      _
    $region3: #{tpu_custom_call.1} parent=1 // loop_header
      %s16 = sphi 0, %s20
      %p17 = scmp.ge.s32.totalorder %s16, 4
      %s26 = sphi 0, %s28
      %s29 = sphi 0, %s26
      %s30 = sphi 0, %s29
      %s46 = sphi 0, %s30
      %s50 = sphi 0, %s50
      %s52 = sphi 0, %s50
      %s53 = sphi 0, %s52
      %s67 = sphi 0, %s53
      %s71 = sphi 0, %s71
      %s73 = sphi 0, %s71
      %s74 = sphi 0, %s73
      %s88 = sphi 0, %s74
      %s92 = sphi 0, %s92
      %s94 = sphi 0, %s92
      %s95 = sphi 0, %s94
      %s109 = sphi 0, %s95
      %s113 = sphi 0, %s113
      %s115 = sphi 0, %s113
      %s116 = sphi 0, %s115
      %s130 = sphi 0, %s116
      %s136 = sphi 0, %s138
      %s139 = sphi 0, %s136
      %s140 = sphi 0, %s139
      %s156 = sphi 0, %s140
    $region4: #{tpu_custom_call.1} parent=1 // loop_header_branch
      %19 = sbr.rel (%p17) target = $region8
    $region5: #{tpu_custom_call.1} parent=1 // loop_body
      %s21 = ssub.s32 %s16, 1
      %s22 = ssub.s32 %s16, 2
      %s23 = sadd.s32 %s16, 1
      %s24 = ssub.s32 %s16, %s23
      %p25 = scmp.eq.s32.totalorder %s24, 0
      %s27 = sadd.s32 %s26, 1
      %s28 = scalar_select %p25, %s26, %s27
      %p31 = pneg %p25
      %p32 = scmp.eq.s32.totalorder %s16, 1
      %p33 = por %p31, %p32
      %p34 = scmp.ne.s32.totalorder %s26, %s29
      %p35 = scmp.eq.s32.totalorder %s16, 0
      %p36 = por %p34, %p35
      %p37 = scmp.ne.s32.totalorder %s26, %s29
      %p38 = scmp.eq.s32.totalorder %s21, 1
      %p39 = por %p37, %p38
      %p40 = scmp.ne.s32.totalorder %s29, %s30
      %p41 = scmp.eq.s32.totalorder %s21, 0
      %p42 = por %p40, %p41
      %p43 = scmp.ne.s32.totalorder %s29, %s30
      %p44 = scmp.eq.s32.totalorder %s22, 1
      %p45 = por %p43, %p44
      %p47 = scmp.ne.s32.totalorder %s30, %s46
      %p48 = scmp.eq.s32.totalorder %s22, 0
      %p49 = por %p47, %p48
      %s51 = sadd.s32 %s50, 1
      %p54 = scmp.eq.s32.totalorder %s16, 1
      %p55 = scmp.ne.s32.totalorder %s50, %s52
      %p56 = scmp.eq.s32.totalorder %s16, 0
      %p57 = por %p55, %p56
      %p58 = scmp.ne.s32.totalorder %s50, %s52
      %p59 = scmp.eq.s32.totalorder %s21, 1
      %p60 = por %p58, %p59
      %p61 = scmp.ne.s32.totalorder %s52, %s53
      %p62 = scmp.eq.s32.totalorder %s21, 0
      %p63 = por %p61, %p62
      %p64 = scmp.ne.s32.totalorder %s52, %s53
      %p65 = scmp.eq.s32.totalorder %s22, 1
      %p66 = por %p64, %p65
      %p68 = scmp.ne.s32.totalorder %s53, %s67
      %p69 = scmp.eq.s32.totalorder %s22, 0
      %p70 = por %p68, %p69
      %s72 = sadd.s32 %s71, 1
      %p75 = scmp.eq.s32.totalorder %s16, 1
      %p76 = scmp.ne.s32.totalorder %s71, %s73
      %p77 = scmp.eq.s32.totalorder %s16, 0
      %p78 = por %p76, %p77
      %p79 = scmp.ne.s32.totalorder %s71, %s73
      %p80 = scmp.eq.s32.totalorder %s21, 1
      %p81 = por %p79, %p80
      %p82 = scmp.ne.s32.totalorder %s73, %s74
      %p83 = scmp.eq.s32.totalorder %s21, 0
      %p84 = por %p82, %p83
      %p85 = scmp.ne.s32.totalorder %s73, %s74
      %p86 = scmp.eq.s32.totalorder %s22, 1
      %p87 = por %p85, %p86
      %p89 = scmp.ne.s32.totalorder %s74, %s88
      %p90 = scmp.eq.s32.totalorder %s22, 0
      %p91 = por %p89, %p90
      %s93 = sadd.s32 %s92, 1
      %p96 = scmp.eq.s32.totalorder %s16, 1
      %p97 = scmp.ne.s32.totalorder %s92, %s94
      %p98 = scmp.eq.s32.totalorder %s16, 0
      %p99 = por %p97, %p98
      %p100 = scmp.ne.s32.totalorder %s92, %s94
      %p101 = scmp.eq.s32.totalorder %s21, 1
      %p102 = por %p100, %p101
      %p103 = scmp.ne.s32.totalorder %s94, %s95
      %p104 = scmp.eq.s32.totalorder %s21, 0
      %p105 = por %p103, %p104
      %p106 = scmp.ne.s32.totalorder %s94, %s95
      %p107 = scmp.eq.s32.totalorder %s22, 1
      %p108 = por %p106, %p107
      %p110 = scmp.ne.s32.totalorder %s95, %s109
      %p111 = scmp.eq.s32.totalorder %s22, 0
      %p112 = por %p110, %p111
      %s114 = sadd.s32 %s113, 1
      %p117 = scmp.eq.s32.totalorder %s16, 1
      %p118 = scmp.ne.s32.totalorder %s113, %s115
      %p119 = scmp.eq.s32.totalorder %s16, 0
      %p120 = por %p118, %p119
      %p121 = scmp.ne.s32.totalorder %s113, %s115
      %p122 = scmp.eq.s32.totalorder %s21, 1
      %p123 = por %p121, %p122
      %p124 = scmp.ne.s32.totalorder %s115, %s116
      %p125 = scmp.eq.s32.totalorder %s21, 0
      %p126 = por %p124, %p125
      %p127 = scmp.ne.s32.totalorder %s115, %s116
      %p128 = scmp.eq.s32.totalorder %s22, 1
      %p129 = por %p127, %p128
      %p131 = scmp.ne.s32.totalorder %s116, %s130
      %p132 = scmp.eq.s32.totalorder %s22, 0
      %p133 = por %p131, %p132
      %s134 = ssub.s32 %s16, %s23
      %p135 = scmp.eq.s32.totalorder %s134, 0
      %s137 = sadd.s32 %s136, 1
      %s138 = scalar_select %p135, %s136, %s137
      %p141 = pneg %p135
      %p142 = scmp.eq.s32.totalorder %s16, 1
      %p143 = por %p141, %p142
      %p144 = scmp.ne.s32.totalorder %s136, %s139
      %p145 = scmp.eq.s32.totalorder %s16, 0
      %p146 = por %p144, %p145
      %p147 = scmp.ne.s32.totalorder %s136, %s139
      %p148 = scmp.eq.s32.totalorder %s21, 1
      %p149 = por %p147, %p148
      %p150 = scmp.ne.s32.totalorder %s139, %s140
      %p151 = scmp.eq.s32.totalorder %s21, 0
      %p152 = por %p150, %p151
      %p153 = scmp.ne.s32.totalorder %s139, %s140
      %p154 = scmp.eq.s32.totalorder %s22, 1
      %p155 = por %p153, %p154
      %p157 = scmp.ne.s32.totalorder %s140, %s156
      %p158 = scmp.eq.s32.totalorder %s22, 0
      %p159 = por %p157, %p158
      %p160 = scmp.le.s32.totalorder 1, %s16
      %p161 = scmp.lt.s32.totalorder %s16, 3
      %p162 = pnand %p160, %p161
      %p163 = pneg %p162
      // Predicated region
      $region9: #{tpu_custom_call.1} parent=5 // pred_check
        _
      $region10: #{tpu_custom_call.1} parent=5 // pred_check_branch
        %165 = sbr.rel (%p162) target = $region12
      $region11: #{tpu_custom_call.1} parent=5 // pred_region
        %s166 = ssub.s32 %s16, 1
        // Predicated region
        $region13: #{tpu_custom_call.1} parent=11 // pred_check
          %p167 = pneg %p63
        $region14: #{tpu_custom_call.1} parent=11 // pred_check_branch
          %169 = sbr.rel (%p167) target = $region16
        $region15: #{tpu_custom_call.1} parent=11 // pred_region
          %s171 = ssub.s32 4096, 4096
          %172 = vsyncadd [#allocation3], %s171
          %s173 = sshll.u32 [#allocation2], 4
          %s174 = int_to_ptr.vmem [resolvable:$true] %s173
          %179 = dma.hbm_to_vmem [thread:$0]  %s1, 4096, %s174, [#allocation3], 256, 256, 16
        $region16: #{tpu_custom_call.1} parent=11 // pred_fallthru
          _
        // Predicated region
        $region17: #{tpu_custom_call.1} parent=11 // pred_check
          %p180 = pneg %p84
        $region18: #{tpu_custom_call.1} parent=11 // pred_check_branch
          %182 = sbr.rel (%p180) target = $region20
        $region19: #{tpu_custom_call.1} parent=11 // pred_region
          _
        $region20: #{tpu_custom_call.1} parent=11 // pred_fallthru
          _
        // Predicated region
        $region21: #{tpu_custom_call.1} parent=11 // pred_check
          %p183 = pneg %p105
        $region22: #{tpu_custom_call.1} parent=11 // pred_check_branch
          %185 = sbr.rel (%p183) target = $region24
        $region23: #{tpu_custom_call.1} parent=11 // pred_region
          %s187 = ssub.s32 4096, 4096
          %188 = vsyncadd [#allocation6], %s187
          %s189 = sshll.u32 [#allocation5], 4
          %s190 = int_to_ptr.vmem [resolvable:$true] %s189
          %195 = dma.hbm_to_vmem [thread:$0]  %s3, 4096, %s190, [#allocation6], 64, 64, 4
        $region24: #{tpu_custom_call.1} parent=11 // pred_fallthru
          _
        // Predicated region
        $region25: #{tpu_custom_call.1} parent=11 // pred_check
          %p196 = pneg %p126
        $region26: #{tpu_custom_call.1} parent=11 // pred_check_branch
          %198 = sbr.rel (%p196) target = $region28
        $region27: #{tpu_custom_call.1} parent=11 // pred_region
          _
        $region28: #{tpu_custom_call.1} parent=11 // pred_fallthru
          _
      $region12: #{tpu_custom_call.1} parent=5 // pred_fallthru
        _
      %p199 = scmp.lt.s32.totalorder %s16, 2
      // Predicated region
      $region29: #{tpu_custom_call.1} parent=5 // pred_check
        %p200 = pneg %p199
      $region30: #{tpu_custom_call.1} parent=5 // pred_check_branch
        %202 = sbr.rel (%p200) target = $region32
      $region31: #{tpu_custom_call.1} parent=5 // pred_region
        // Predicated region
        $region33: #{tpu_custom_call.1} parent=31 // pred_check
          %p203 = pneg %p36
        $region34: #{tpu_custom_call.1} parent=31 // pred_check_branch
          %205 = sbr.rel (%p203) target = $region36
        $region35: #{tpu_custom_call.1} parent=31 // pred_region
          %s206 = smul.u32 13, %s16
          %p207 = scmp.lt.s32.totalorder %s206, 25
          %s208 = scalar_select %p207, %s206, 25
          %s209 = smul.addr %s208, 8
          %s210 = scalar_lea.vmem %s0, %s209
          %s211 = smul.u32 13, %s16
        $region36: #{tpu_custom_call.1} parent=31 // pred_fallthru
          _
      $region32: #{tpu_custom_call.1} parent=5 // pred_fallthru
        _
      %p212 = scmp.le.s32.totalorder 1, %s16
      %p213 = scmp.lt.s32.totalorder %s16, 3
      %p214 = pnand %p212, %p213
      %p215 = pneg %p214
      // Predicated region
      $region37: #{tpu_custom_call.1} parent=5 // pred_check
        _
      $region38: #{tpu_custom_call.1} parent=5 // pred_check_branch
        %217 = sbr.rel (%p214) target = $region40
      $region39: #{tpu_custom_call.1} parent=5 // pred_region
        %s218 = ssub.s32 %s16, 1
        // Predicated region
        $region41: #{tpu_custom_call.1} parent=39 // pred_check
          %p219 = pneg %p63
        $region42: #{tpu_custom_call.1} parent=39 // pred_check_branch
          %221 = sbr.rel (%p219) target = $region44
        $region43: #{tpu_custom_call.1} parent=39 // pred_region
          %222 = dma.done [#allocation3], 4096
        $region44: #{tpu_custom_call.1} parent=39 // pred_fallthru
          _
        // Predicated region
        $region45: #{tpu_custom_call.1} parent=39 // pred_check
          %p223 = pneg %p105
        $region46: #{tpu_custom_call.1} parent=39 // pred_check_branch
          %225 = sbr.rel (%p223) target = $region48
        $region47: #{tpu_custom_call.1} parent=39 // pred_region
          %226 = dma.done [#allocation6], 4096
        $region48: #{tpu_custom_call.1} parent=39 // pred_fallthru
          _
        %s227 = smul.u32 13, %s21
        %p228 = scmp.lt.s32.totalorder %s227, 25
        %s229 = scalar_select %p228, %s227, 25
        %s230 = smul.addr %s229, 8
        %s231 = scalar_lea.vmem %s0, %s230
        %p232 = pneg %p42
        %p233 = pneg %p39
        %p234 = pneg %p63
        %p235 = pneg %p60
        %p236 = pneg %p84
        %p237 = pneg %p81
        %p238 = pneg %p105
        %p239 = pneg %p102
        %p240 = pneg %p126
        %p241 = pneg %p123
        %p242 = pneg %p152
        %p243 = pneg %p149
        %s244 = sand.u32 %s139, 1
        %s245 = scalar_lea.sflag [#allocation4], %s244
        %s246 = sand.u32 %s139, 1
        %s247 = smul.addr %s246, 104
        %s248 = scalar_lea.vmem [#allocation7], %s247
        %s249 = smul.u32 13, %s21
        %p250 = scmp.lt.s32.totalorder %s249, 25
        %s251 = scalar_select %p250, %s249, 25
        %s252 = smul.addr %s251, 8
        %s253 = scalar_lea.vmem %s0, %s252
        %s254 = smul.u32 13, %s21
        %s255 = smul.u32 13, %s21
        %v258 = vld [vmem:[%s253] sm:$0xff]
        %v259 = vld [vmem:[%s253 + $0x8] sm:$0xff]
        %v260 = vld [vmem:[%s253 + $0x10] sm:$0xff]
        %v261 = vld [vmem:[%s253 + $0x18] sm:$0xff]
        %v262 = vld [vmem:[%s253 + $0x20] sm:$0xff]
        %v263 = vld [vmem:[%s253 + $0x28] sm:$0xff]
        %v264 = vld [vmem:[%s253 + $0x30] sm:$0xff]
        %v265 = vld [vmem:[%s253 + $0x38] sm:$0xff]
        %v266 = vld [vmem:[%s253 + $0x40] sm:$0xff]
        %v267 = vld [vmem:[%s253 + $0x48] sm:$0xff]
        %v268 = vld [vmem:[%s253 + $0x50] sm:$0xff]
        %v269 = vld [vmem:[%s253 + $0x58] sm:$0xff]
        %v270 = vld [vmem:[%s253 + $0x60] sm:$0xff]
        %v271 = vlaneseq
        %v272 = vand.u32 %v271, 127
        %273 = vset.pattern.permute.xlu0 0
        %274 = vperm.xlu0 %273, %v258
        %v275 = vpop.permute.xlu0 %274
        %276 = vset.pattern.permute.xlu0 0
        %277 = vperm.xlu0 %276, %v259
        %v278 = vpop.permute.xlu0 %277
        %279 = vset.pattern.permute.xlu0 0
        %280 = vperm.xlu0 %279, %v260
        %v281 = vpop.permute.xlu0 %280
        %282 = vset.pattern.permute.xlu0 0
        %283 = vperm.xlu0 %282, %v261
        %v284 = vpop.permute.xlu0 %283
        %285 = vset.pattern.permute.xlu0 0
        %286 = vperm.xlu0 %285, %v262
        %v287 = vpop.permute.xlu0 %286
        %288 = vset.pattern.permute.xlu0 0
        %289 = vperm.xlu0 %288, %v263
        %v290 = vpop.permute.xlu0 %289
        %291 = vset.pattern.permute.xlu0 0
        %292 = vperm.xlu0 %291, %v264
        %v293 = vpop.permute.xlu0 %292
        %294 = vset.pattern.permute.xlu0 0
        %295 = vperm.xlu0 %294, %v265
        %v296 = vpop.permute.xlu0 %295
        %297 = vset.pattern.permute.xlu0 0
        %298 = vperm.xlu0 %297, %v266
        %v299 = vpop.permute.xlu0 %298
        %300 = vset.pattern.permute.xlu0 0
        %301 = vperm.xlu0 %300, %v267
        %v302 = vpop.permute.xlu0 %301
        %303 = vset.pattern.permute.xlu0 0
        %304 = vperm.xlu0 %303, %v268
        %v305 = vpop.permute.xlu0 %304
        %306 = vset.pattern.permute.xlu0 0
        %307 = vperm.xlu0 %306, %v269
        %v308 = vpop.permute.xlu0 %307
        %309 = vset.pattern.permute.xlu0 0
        %310 = vperm.xlu0 %309, %v270
        %v311 = vpop.permute.xlu0 %310
        %vm312 = vcmp.eq.s32.totalorder %v275, %v272
        %vm313 = vcmp.eq.s32.totalorder %v278, %v272
        %vm314 = vcmp.eq.s32.totalorder %v281, %v272
        %vm315 = vcmp.eq.s32.totalorder %v284, %v272
        %vm316 = vcmp.eq.s32.totalorder %v287, %v272
        %vm317 = vcmp.eq.s32.totalorder %v290, %v272
        %vm318 = vcmp.eq.s32.totalorder %v293, %v272
        %vm319 = vcmp.eq.s32.totalorder %v296, %v272
        %vm320 = vcmp.eq.s32.totalorder %v299, %v272
        %vm321 = vcmp.eq.s32.totalorder %v302, %v272
        %vm322 = vcmp.eq.s32.totalorder %v305, %v272
        %vm323 = vcmp.eq.s32.totalorder %v308, %v272
        %vm324 = vcmp.eq.s32.totalorder %v311, %v272
        %vm325 = vcmp.gt.s32.totalorder %v258, 0
        %vm326 = vcmp.gt.s32.totalorder %v259, 0
        %vm327 = vcmp.gt.s32.totalorder %v260, 0
        %vm328 = vcmp.gt.s32.totalorder %v261, 0
        %vm329 = vcmp.gt.s32.totalorder %v262, 0
        %vm330 = vcmp.gt.s32.totalorder %v263, 0
        %vm331 = vcmp.gt.s32.totalorder %v264, 0
        %vm332 = vcmp.gt.s32.totalorder %v265, 0
        %vm333 = vcmp.gt.s32.totalorder %v266, 0
        %vm334 = vcmp.gt.s32.totalorder %v267, 0
        %vm335 = vcmp.gt.s32.totalorder %v268, 0
        %vm336 = vcmp.gt.s32.totalorder %v269, 0
        %vm337 = vcmp.gt.s32.totalorder %v270, 0
        %v338 = vsel %vm325, 1, 0
        %v339 = vsel %vm326, 1, 0
        %v340 = vsel %vm327, 1, 0
        %v341 = vsel %vm328, 1, 0
        %v342 = vsel %vm329, 1, 0
        %v343 = vsel %vm330, 1, 0
        %v344 = vsel %vm331, 1, 0
        %v345 = vsel %vm332, 1, 0
        %v346 = vsel %vm333, 1, 0
        %v347 = vsel %vm334, 1, 0
        %v348 = vsel %vm335, 1, 0
        %v349 = vsel %vm336, 1, 0
        %v350 = vsel %vm337, 1, 0
        %351 = vset.pattern.permute.xlu0 0
        %352 = vperm.xlu0 %351, %v338
        %v353 = vpop.permute.xlu0 %352
        %354 = vset.pattern.permute.xlu0 0
        %355 = vperm.xlu0 %354, %v339
        %v356 = vpop.permute.xlu0 %355
        %357 = vset.pattern.permute.xlu0 0
        %358 = vperm.xlu0 %357, %v340
        %v359 = vpop.permute.xlu0 %358
        %360 = vset.pattern.permute.xlu0 0
        %361 = vperm.xlu0 %360, %v341
        %v362 = vpop.permute.xlu0 %361
        %363 = vset.pattern.permute.xlu0 0
        %364 = vperm.xlu0 %363, %v342
        %v365 = vpop.permute.xlu0 %364
        %366 = vset.pattern.permute.xlu0 0
        %367 = vperm.xlu0 %366, %v343
        %v368 = vpop.permute.xlu0 %367
        %369 = vset.pattern.permute.xlu0 0
        %370 = vperm.xlu0 %369, %v344
        %v371 = vpop.permute.xlu0 %370
        %372 = vset.pattern.permute.xlu0 0
        %373 = vperm.xlu0 %372, %v345
        %v374 = vpop.permute.xlu0 %373
        %375 = vset.pattern.permute.xlu0 0
        %376 = vperm.xlu0 %375, %v346
        %v377 = vpop.permute.xlu0 %376
        %378 = vset.pattern.permute.xlu0 0
        %379 = vperm.xlu0 %378, %v347
        %v380 = vpop.permute.xlu0 %379
        %381 = vset.pattern.permute.xlu0 0
        %382 = vperm.xlu0 %381, %v348
        %v383 = vpop.permute.xlu0 %382
        %384 = vset.pattern.permute.xlu0 0
        %385 = vperm.xlu0 %384, %v349
        %v386 = vpop.permute.xlu0 %385
        %387 = vset.pattern.permute.xlu0 0
        %388 = vperm.xlu0 %387, %v350
        %v389 = vpop.permute.xlu0 %388
        %vm390 = vcmp.eq.s32.totalorder %v353, 1
        %vm391 = vcmp.eq.s32.totalorder %v356, 1
        %vm392 = vcmp.eq.s32.totalorder %v359, 1
        %vm393 = vcmp.eq.s32.totalorder %v362, 1
        %vm394 = vcmp.eq.s32.totalorder %v365, 1
        %vm395 = vcmp.eq.s32.totalorder %v368, 1
        %vm396 = vcmp.eq.s32.totalorder %v371, 1
        %vm397 = vcmp.eq.s32.totalorder %v374, 1
        %vm398 = vcmp.eq.s32.totalorder %v377, 1
        %vm399 = vcmp.eq.s32.totalorder %v380, 1
        %vm400 = vcmp.eq.s32.totalorder %v383, 1
        %vm401 = vcmp.eq.s32.totalorder %v386, 1
        %vm402 = vcmp.eq.s32.totalorder %v389, 1
        %vm403 = vmand %vm312, %vm390
        %vm404 = vmand %vm313, %vm391
        %vm405 = vmand %vm314, %vm392
        %vm406 = vmand %vm315, %vm393
        %vm407 = vmand %vm316, %vm394
        %vm408 = vmand %vm317, %vm395
        %vm409 = vmand %vm318, %vm396
        %vm410 = vmand %vm319, %vm397
        %vm411 = vmand %vm320, %vm398
        %vm412 = vmand %vm321, %vm399
        %vm413 = vmand %vm322, %vm400
        %vm414 = vmand %vm323, %vm401
        %vm415 = vmand %vm324, %vm402
        %v416 = vsel %vm403, 1, 0
        %v417 = vsel %vm404, 1, 0
        %v418 = vsel %vm405, 1, 0
        %v419 = vsel %vm406, 1, 0
        %v420 = vsel %vm407, 1, 0
        %v421 = vsel %vm408, 1, 0
        %v422 = vsel %vm409, 1, 0
        %v423 = vsel %vm410, 1, 0
        %v424 = vsel %vm411, 1, 0
        %v425 = vsel %vm412, 1, 0
        %v426 = vsel %vm413, 1, 0
        %v427 = vsel %vm414, 1, 0
        %v428 = vsel %vm415, 1, 0
        %v429 = vcvt.s32.f32 %v416
        %v430 = vcvt.s32.f32 %v417
        %v431 = vcvt.s32.f32 %v418
        %v432 = vcvt.s32.f32 %v419
        %v433 = vcvt.s32.f32 %v420
        %v434 = vcvt.s32.f32 %v421
        %v435 = vcvt.s32.f32 %v422
        %v436 = vcvt.s32.f32 %v423
        %v437 = vcvt.s32.f32 %v424
        %v438 = vcvt.s32.f32 %v425
        %v439 = vcvt.s32.f32 %v426
        %v440 = vcvt.s32.f32 %v427
        %v441 = vcvt.s32.f32 %v428
        %v442 = vpack.c.bf16 %v430, %v429
        %v443 = vpack.c.bf16 %v432, %v431
        %v444 = vpack.c.bf16 %v434, %v433
        %v445 = vpack.c.bf16 %v436, %v435
        %v446 = vpack.c.bf16 %v438, %v437
        %v447 = vpack.c.bf16 %v440, %v439
        %v448 = vpack.c.bf16 %v441, %v441
        %v449 = vld [vmem:[#allocation2] sm:$0xff]
        %v450 = vld [vmem:[#allocation2 + $0x8] sm:$0xff]
        %v451 = vld [vmem:[#allocation2 + $0x10] sm:$0xff]
        %v452 = vld [vmem:[#allocation2 + $0x18] sm:$0xff]
        %v453 = vld [vmem:[#allocation2 + $0x20] sm:$0xff]
        %v454 = vld [vmem:[#allocation2 + $0x28] sm:$0xff]
        %v455 = vld [vmem:[#allocation2 + $0x30] sm:$0xff]
        %v456 = vld [vmem:[#allocation2 + $0x38] sm:$0xff]
        %v457 = vld [vmem:[#allocation2 + $0x40] sm:$0xff]
        %v458 = vld [vmem:[#allocation2 + $0x48] sm:$0xff]
        %v459 = vld [vmem:[#allocation2 + $0x50] sm:$0xff]
        %v460 = vld [vmem:[#allocation2 + $0x58] sm:$0xff]
        %v461 = vld [vmem:[#allocation2 + $0x60] sm:$0xff]
        %v462 = vld [vmem:[#allocation2 + $0x68] sm:$0xff]
        %v463 = vld [vmem:[#allocation2 + $0x70] sm:$0xff]
        %v464 = vld [vmem:[#allocation2 + $0x78] sm:$0xff]
        %v465 = vld [vmem:[#allocation2 + $0x80] sm:$0xff]
        %v466 = vld [vmem:[#allocation2 + $0x88] sm:$0xff]
        %v467 = vld [vmem:[#allocation2 + $0x90] sm:$0xff]
        %v468 = vld [vmem:[#allocation2 + $0x98] sm:$0xff]
        %v469 = vld [vmem:[#allocation2 + $0xa0] sm:$0xff]
        %v470 = vld [vmem:[#allocation2 + $0xa8] sm:$0xff]
        %v471 = vld [vmem:[#allocation2 + $0xb0] sm:$0xff]
        %v472 = vld [vmem:[#allocation2 + $0xb8] sm:$0xff]
        %v473 = vld [vmem:[#allocation2 + $0xc0] sm:$0xff]
        %v474 = vld [vmem:[#allocation2 + $0xc8] sm:$0xff]
        %v475 = vld [vmem:[#allocation2 + $0xd0] sm:$0xff]
        %v476 = vld [vmem:[#allocation2 + $0xd8] sm:$0xff]
        %v477 = vld [vmem:[#allocation2 + $0xe0] sm:$0xff]
        %v478 = vld [vmem:[#allocation2 + $0xe8] sm:$0xff]
        %v479 = vld [vmem:[#allocation2 + $0xf0] sm:$0xff]
        %v480 = vld [vmem:[#allocation2 + $0xf8] sm:$0xff]
        %v481 = vld [vmem:[%s2] sm:$0xf]
        %v483 = vlaneseq
        %v484 = vshrl.u32 %v483, 7
        %v485 = vsub.s32 0, %v484
        %v486 = vrot.slane %v481, %v485
        %v487 = vlaneseq
        %v488 = vshrl.u32 %v487, 7
        %v489 = vsub.s32 1, %v488
        %v490 = vrot.slane %v481, %v489
        %v491 = vlaneseq
        %v492 = vshrl.u32 %v491, 7
        %v493 = vsub.s32 2, %v492
        %v494 = vrot.slane %v481, %v493
        %v495 = vlaneseq
        %v496 = vshrl.u32 %v495, 7
        %v497 = vsub.s32 3, %v496
        %v498 = vrot.slane %v481, %v497
        %v535 = vunpack.c.l.b16 %v449
        %v536 = vunpack.c.h.b16 %v449
        %v537 = vunpack.c.l.b16 %v450
        %v538 = vunpack.c.h.b16 %v450
        %v539 = vunpack.c.l.b16 %v451
        %v540 = vunpack.c.h.b16 %v451
        %v541 = vunpack.c.l.b16 %v452
        %v542 = vunpack.c.h.b16 %v452
        %v543 = vunpack.c.l.b16 %v453
        %v544 = vunpack.c.h.b16 %v453
        %v545 = vunpack.c.l.b16 %v454
        %v546 = vunpack.c.h.b16 %v454
        %v547 = vunpack.c.l.b16 %v455
        %v548 = vunpack.c.h.b16 %v455
        %v549 = vunpack.c.l.b16 %v456
        %v550 = vunpack.c.h.b16 %v456
        %v551 = vunpack.c.l.b16 %v457
        %v552 = vunpack.c.h.b16 %v457
        %v553 = vunpack.c.l.b16 %v458
        %v554 = vunpack.c.h.b16 %v458
        %v555 = vunpack.c.l.b16 %v459
        %v556 = vunpack.c.h.b16 %v459
        %v557 = vunpack.c.l.b16 %v460
        %v558 = vunpack.c.h.b16 %v460
        %v559 = vunpack.c.l.b16 %v461
        %v560 = vunpack.c.h.b16 %v461
        %v561 = vunpack.c.l.b16 %v462
        %v562 = vunpack.c.h.b16 %v462
        %v563 = vunpack.c.l.b16 %v463
        %v564 = vunpack.c.h.b16 %v463
        %v565 = vunpack.c.l.b16 %v464
        %v566 = vunpack.c.h.b16 %v464
        %v567 = vunpack.c.l.b16 %v465
        %v568 = vunpack.c.h.b16 %v465
        %v569 = vunpack.c.l.b16 %v466
        %v570 = vunpack.c.h.b16 %v466
        %v571 = vunpack.c.l.b16 %v467
        %v572 = vunpack.c.h.b16 %v467
        %v573 = vunpack.c.l.b16 %v468
        %v574 = vunpack.c.h.b16 %v468
        %v575 = vunpack.c.l.b16 %v469
        %v576 = vunpack.c.h.b16 %v469
        %v577 = vunpack.c.l.b16 %v470
        %v578 = vunpack.c.h.b16 %v470
        %v579 = vunpack.c.l.b16 %v471
        %v580 = vunpack.c.h.b16 %v471
        %v581 = vunpack.c.l.b16 %v472
        %v582 = vunpack.c.h.b16 %v472
        %v583 = vunpack.c.l.b16 %v473
        %v584 = vunpack.c.h.b16 %v473
        %v585 = vunpack.c.l.b16 %v474
        %v586 = vunpack.c.h.b16 %v474
        %v587 = vunpack.c.l.b16 %v475
        %v588 = vunpack.c.h.b16 %v475
        %v589 = vunpack.c.l.b16 %v476
        %v590 = vunpack.c.h.b16 %v476
        %v591 = vunpack.c.l.b16 %v477
        %v592 = vunpack.c.h.b16 %v477
        %v593 = vunpack.c.l.b16 %v478
        %v594 = vunpack.c.h.b16 %v478
        %v595 = vunpack.c.l.b16 %v479
        %v596 = vunpack.c.h.b16 %v479
        %v597 = vunpack.c.l.b16 %v480
        %v598 = vunpack.c.h.b16 %v480
        %v599 = vpack.c.b16 %v539, %v535
        %v600 = vpack.c.b16 %v540, %v536
        %v601 = vpack.c.b16 %v541, %v537
        %v602 = vpack.c.b16 %v542, %v538
        %v603 = vpack.c.b16 %v547, %v543
        %v604 = vpack.c.b16 %v548, %v544
        %v605 = vpack.c.b16 %v549, %v545
        %v606 = vpack.c.b16 %v550, %v546
        %v607 = vpack.c.b16 %v555, %v551
        %v608 = vpack.c.b16 %v556, %v552
        %v609 = vpack.c.b16 %v557, %v553
        %v610 = vpack.c.b16 %v558, %v554
        %v611 = vpack.c.b16 %v563, %v559
        %v612 = vpack.c.b16 %v564, %v560
        %v613 = vpack.c.b16 %v565, %v561
        %v614 = vpack.c.b16 %v566, %v562
        %v615 = vpack.c.b16 %v571, %v567
        %v616 = vpack.c.b16 %v572, %v568
        %v617 = vpack.c.b16 %v573, %v569
        %v618 = vpack.c.b16 %v574, %v570
        %v619 = vpack.c.b16 %v579, %v575
        %v620 = vpack.c.b16 %v580, %v576
        %v621 = vpack.c.b16 %v581, %v577
        %v622 = vpack.c.b16 %v582, %v578
        %v623 = vpack.c.b16 %v587, %v583
        %v624 = vpack.c.b16 %v588, %v584
        %v625 = vpack.c.b16 %v589, %v585
        %v626 = vpack.c.b16 %v590, %v586
        %v627 = vpack.c.b16 %v595, %v591
        %v628 = vpack.c.b16 %v596, %v592
        %v629 = vpack.c.b16 %v597, %v593
        %v630 = vpack.c.b16 %v598, %v594
        %663 = vmatprep.subr.bf16.mxu0 %v600
        %664 = vmatpush1.bf16.msra.mxu0 %v599
        %665 = vmatprep.subr.bf16.mxu0 %v604
        %666 = vmatpush1.bf16.msra.mxu0 %v603
        %667 = vmatprep.subr.bf16.mxu0 %v608
        %668 = vmatpush1.bf16.msra.mxu0 %v607
        %669 = vmatprep.subr.bf16.mxu0 %v612
        %670 = vmatpush1.bf16.msra.mxu0 %v611
        %671 = vmatprep.subr.bf16.mxu0 %v616
        %672 = vmatpush1.bf16.msra.mxu0 %v615
        %673 = vmatprep.subr.bf16.mxu0 %v620
        %674 = vmatpush1.bf16.msra.mxu0 %v619
        %675 = vmatprep.subr.bf16.mxu0 %v624
        %676 = vmatpush1.bf16.msra.mxu0 %v623
        %677 = vmatprep.subr.bf16.mxu0 %v628
        %678 = vmatpush1.bf16.msra.mxu0 %v627
        %679 = vmatprep.subr.bf16.mxu0 0
        %680 = vmatpush1.bf16.msra.mxu0 0
        %681 = vmatprep.subr.bf16.mxu0 0
        %682 = vmatpush1.bf16.msra.mxu0 0
        %683 = vmatprep.subr.bf16.mxu0 0
        %684 = vmatpush1.bf16.msra.mxu0 0
        %685 = vmatprep.subr.bf16.mxu0 0
        %686 = vmatpush1.bf16.msra.mxu0 0
        %687 = vmatprep.subr.bf16.mxu0 0
        %688 = vmatpush1.bf16.msra.mxu0 0
        %689 = vmatprep.subr.bf16.mxu0 0
        %690 = vmatpush1.bf16.msra.mxu0 0
        %691 = vmatprep.subr.bf16.mxu0 0
        %692 = vmatpush1.bf16.msra.mxu0 0
        %693 = vmatprep.subr.bf16.mxu0 0
        %694 = vmatpush1.bf16.msra.mxu0 0
        %695 = vmatprep.mubr.bf16.mxu0 0
        %696 = vmatmul.mubr.bf16.gmra.mrb[0].mxu0 %v442
        %v697 = vpop.f32.mrb[0].mxu0
        %v698 = vadd.f32 %v486, %v697
        %v699 = vpop.f32.mrb[0].mxu0
        %v700 = vadd.f32 %v490, %v699
        %v701 = vpop.f32.mrb[0].mxu0
        %v702 = vadd.f32 %v486, %v701
        %v703 = vpop.f32.mrb[0].mxu0
        %v704 = vadd.f32 %v490, %v703
        %705 = vmatprep.mubr.bf16.mxu0 0
        %706 = vmatmul.mubr.bf16.gmra.mrb[0].mxu0 %v443
        %v707 = vpop.f32.mrb[0].mxu0
        %v708 = vadd.f32 %v486, %v707
        %v709 = vpop.f32.mrb[0].mxu0
        %v710 = vadd.f32 %v490, %v709
        %v711 = vpop.f32.mrb[0].mxu0
        %v712 = vadd.f32 %v486, %v711
        %v713 = vpop.f32.mrb[0].mxu0
        %v714 = vadd.f32 %v490, %v713
        %715 = vmatprep.mubr.bf16.mxu0 0
        %716 = vmatmul.mubr.bf16.gmra.mrb[0].mxu0 %v444
        %v717 = vpop.f32.mrb[0].mxu0
        %v718 = vadd.f32 %v486, %v717
        %v719 = vpop.f32.mrb[0].mxu0
        %v720 = vadd.f32 %v490, %v719
        %v721 = vpop.f32.mrb[0].mxu0
        %v722 = vadd.f32 %v486, %v721
        %v723 = vpop.f32.mrb[0].mxu0
        %v724 = vadd.f32 %v490, %v723
        %725 = vmatprep.mubr.bf16.mxu0 0
        %726 = vmatmul.mubr.bf16.gmra.mrb[0].mxu0 %v445
        %v727 = vpop.f32.mrb[0].mxu0
        %v728 = vadd.f32 %v486, %v727
        %v729 = vpop.f32.mrb[0].mxu0
        %v730 = vadd.f32 %v490, %v729
        %v731 = vpop.f32.mrb[0].mxu0
        %v732 = vadd.f32 %v486, %v731
        %v733 = vpop.f32.mrb[0].mxu0
        %v734 = vadd.f32 %v490, %v733
        %735 = vmatprep.mubr.bf16.mxu0 0
        %736 = vmatmul.mubr.bf16.gmra.mrb[0].mxu0 %v446
        %v737 = vpop.f32.mrb[0].mxu0
        %v738 = vadd.f32 %v486, %v737
        %v739 = vpop.f32.mrb[0].mxu0
        %v740 = vadd.f32 %v490, %v739
        %v741 = vpop.f32.mrb[0].mxu0
        %v742 = vadd.f32 %v486, %v741
        %v743 = vpop.f32.mrb[0].mxu0
        %v744 = vadd.f32 %v490, %v743
        %745 = vmatprep.mubr.bf16.mxu0 0
        %746 = vmatmul.mubr.bf16.gmra.mrb[0].mxu0 %v447
        %v747 = vpop.f32.mrb[0].mxu0
        %v748 = vadd.f32 %v486, %v747
        %v749 = vpop.f32.mrb[0].mxu0
        %v750 = vadd.f32 %v490, %v749
        %v751 = vpop.f32.mrb[0].mxu0
        %v752 = vadd.f32 %v486, %v751
        %v753 = vpop.f32.mrb[0].mxu0
        %v754 = vadd.f32 %v490, %v753
        %755 = vmatprep.mubr.bf16.mxu0 0
        %756 = vmatmul.mubr.bf16.gmra.mrb[0].mxu0 %v448
        %v757 = vpop.f32.mrb[0].mxu0
        %v758 = vadd.f32 %v486, %v757
        %v759 = vpop.f32.mrb[0].mxu0
        %v760 = vadd.f32 %v490, %v759
        %v761 = vpop.f32.mrb[0].mxu0
        %v762 = vpop.f32.mrb[0].mxu0
        %763 = vdwg.mxu0
        %764 = vmatprep.subr.bf16.mxu0 %v602
        %765 = vmatpush1.bf16.msra.mxu0 %v601
        %766 = vmatprep.subr.bf16.mxu0 %v606
        %767 = vmatpush1.bf16.msra.mxu0 %v605
        %768 = vmatprep.subr.bf16.mxu0 %v610
        %769 = vmatpush1.bf16.msra.mxu0 %v609
        %770 = vmatprep.subr.bf16.mxu0 %v614
        %771 = vmatpush1.bf16.msra.mxu0 %v613
        %772 = vmatprep.subr.bf16.mxu0 %v618
        %773 = vmatpush1.bf16.msra.mxu0 %v617
        %774 = vmatprep.subr.bf16.mxu0 %v622
        %775 = vmatpush1.bf16.msra.mxu0 %v621
        %776 = vmatprep.subr.bf16.mxu0 %v626
        %777 = vmatpush1.bf16.msra.mxu0 %v625
        %778 = vmatprep.subr.bf16.mxu0 %v630
        %779 = vmatpush1.bf16.msra.mxu0 %v629
        %780 = vmatprep.subr.bf16.mxu0 0
        %781 = vmatpush1.bf16.msra.mxu0 0
        %782 = vmatprep.subr.bf16.mxu0 0
        %783 = vmatpush1.bf16.msra.mxu0 0
        %784 = vmatprep.subr.bf16.mxu0 0
        %785 = vmatpush1.bf16.msra.mxu0 0
        %786 = vmatprep.subr.bf16.mxu0 0
        %787 = vmatpush1.bf16.msra.mxu0 0
        %788 = vmatprep.subr.bf16.mxu0 0
        %789 = vmatpush1.bf16.msra.mxu0 0
        %790 = vmatprep.subr.bf16.mxu0 0
        %791 = vmatpush1.bf16.msra.mxu0 0
        %792 = vmatprep.subr.bf16.mxu0 0
        %793 = vmatpush1.bf16.msra.mxu0 0
        %794 = vmatprep.subr.bf16.mxu0 0
        %795 = vmatpush1.bf16.msra.mxu0 0
        %796 = vmatprep.mubr.bf16.mxu0 0
        %797 = vmatmul.mubr.bf16.gmra.mrb[0].mxu0 %v442
        %v798 = vpop.f32.mrb[0].mxu0
        %v799 = vadd.f32 %v494, %v798
        %v800 = vpop.f32.mrb[0].mxu0
        %v801 = vadd.f32 %v498, %v800
        %v802 = vpop.f32.mrb[0].mxu0
        %v803 = vadd.f32 %v494, %v802
        %v804 = vpop.f32.mrb[0].mxu0
        %v805 = vadd.f32 %v498, %v804
        %806 = vmatprep.mubr.bf16.mxu0 0
        %807 = vmatmul.mubr.bf16.gmra.mrb[0].mxu0 %v443
        %v808 = vpop.f32.mrb[0].mxu0
        %v809 = vadd.f32 %v494, %v808
        %v810 = vpop.f32.mrb[0].mxu0
        %v811 = vadd.f32 %v498, %v810
        %v812 = vpop.f32.mrb[0].mxu0
        %v813 = vadd.f32 %v494, %v812
        %v814 = vpop.f32.mrb[0].mxu0
        %v815 = vadd.f32 %v498, %v814
        %816 = vmatprep.mubr.bf16.mxu0 0
        %817 = vmatmul.mubr.bf16.gmra.mrb[0].mxu0 %v444
        %v818 = vpop.f32.mrb[0].mxu0
        %v819 = vadd.f32 %v494, %v818
        %v820 = vpop.f32.mrb[0].mxu0
        %v821 = vadd.f32 %v498, %v820
        %v822 = vpop.f32.mrb[0].mxu0
        %v823 = vadd.f32 %v494, %v822
        %v824 = vpop.f32.mrb[0].mxu0
        %v825 = vadd.f32 %v498, %v824
        %826 = vmatprep.mubr.bf16.mxu0 0
        %827 = vmatmul.mubr.bf16.gmra.mrb[0].mxu0 %v445
        %v828 = vpop.f32.mrb[0].mxu0
        %v829 = vadd.f32 %v494, %v828
        %v830 = vpop.f32.mrb[0].mxu0
        %v831 = vadd.f32 %v498, %v830
        %v832 = vpop.f32.mrb[0].mxu0
        %v833 = vadd.f32 %v494, %v832
        %v834 = vpop.f32.mrb[0].mxu0
        %v835 = vadd.f32 %v498, %v834
        %836 = vmatprep.mubr.bf16.mxu0 0
        %837 = vmatmul.mubr.bf16.gmra.mrb[0].mxu0 %v446
        %v838 = vpop.f32.mrb[0].mxu0
        %v839 = vadd.f32 %v494, %v838
        %v840 = vpop.f32.mrb[0].mxu0
        %v841 = vadd.f32 %v498, %v840
        %v842 = vpop.f32.mrb[0].mxu0
        %v843 = vadd.f32 %v494, %v842
        %v844 = vpop.f32.mrb[0].mxu0
        %v845 = vadd.f32 %v498, %v844
        %846 = vmatprep.mubr.bf16.mxu0 0
        %847 = vmatmul.mubr.bf16.gmra.mrb[0].mxu0 %v447
        %v848 = vpop.f32.mrb[0].mxu0
        %v849 = vadd.f32 %v494, %v848
        %v850 = vpop.f32.mrb[0].mxu0
        %v851 = vadd.f32 %v498, %v850
        %v852 = vpop.f32.mrb[0].mxu0
        %v853 = vadd.f32 %v494, %v852
        %v854 = vpop.f32.mrb[0].mxu0
        %v855 = vadd.f32 %v498, %v854
        %856 = vmatprep.mubr.bf16.mxu0 0
        %857 = vmatmul.mubr.bf16.gmra.mrb[0].mxu0 %v448
        %v858 = vpop.f32.mrb[0].mxu0
        %v859 = vadd.f32 %v494, %v858
        %v860 = vpop.f32.mrb[0].mxu0
        %v861 = vadd.f32 %v498, %v860
        %v862 = vpop.f32.mrb[0].mxu0
        %v863 = vpop.f32.mrb[0].mxu0
        %864 = vdwg.mxu0
        %v865 = vpack.c.bf16 %v702, %v698
        %v866 = vpack.c.bf16 %v704, %v700
        %v867 = vpack.c.bf16 %v803, %v799
        %v868 = vpack.c.bf16 %v805, %v801
        %v869 = vpack.c.bf16 %v712, %v708
        %v870 = vpack.c.bf16 %v714, %v710
        %v871 = vpack.c.bf16 %v813, %v809
        %v872 = vpack.c.bf16 %v815, %v811
        %v873 = vpack.c.bf16 %v722, %v718
        %v874 = vpack.c.bf16 %v724, %v720
        %v875 = vpack.c.bf16 %v823, %v819
        %v876 = vpack.c.bf16 %v825, %v821
        %v877 = vpack.c.bf16 %v732, %v728
        %v878 = vpack.c.bf16 %v734, %v730
        %v879 = vpack.c.bf16 %v833, %v829
        %v880 = vpack.c.bf16 %v835, %v831
        %v881 = vpack.c.bf16 %v742, %v738
        %v882 = vpack.c.bf16 %v744, %v740
        %v883 = vpack.c.bf16 %v843, %v839
        %v884 = vpack.c.bf16 %v845, %v841
        %v885 = vpack.c.bf16 %v752, %v748
        %v886 = vpack.c.bf16 %v754, %v750
        %v887 = vpack.c.bf16 %v853, %v849
        %v888 = vpack.c.bf16 %v855, %v851
        %v889 = vpack.c.bf16 %v758, %v758
        %v890 = vpack.c.bf16 %v760, %v760
        %v891 = vpack.c.bf16 %v859, %v859
        %v892 = vpack.c.bf16 %v861, %v861
        %v893 = vxor.u32 %v865, 2147516416
        %v894 = vxor.u32 %v866, 2147516416
        %v895 = vxor.u32 %v867, 2147516416
        %v896 = vxor.u32 %v868, 2147516416
        %v897 = vxor.u32 %v869, 2147516416
        %v898 = vxor.u32 %v870, 2147516416
        %v899 = vxor.u32 %v871, 2147516416
        %v900 = vxor.u32 %v872, 2147516416
        %v901 = vxor.u32 %v873, 2147516416
        %v902 = vxor.u32 %v874, 2147516416
        %v903 = vxor.u32 %v875, 2147516416
        %v904 = vxor.u32 %v876, 2147516416
        %v905 = vxor.u32 %v877, 2147516416
        %v906 = vxor.u32 %v878, 2147516416
        %v907 = vxor.u32 %v879, 2147516416
        %v908 = vxor.u32 %v880, 2147516416
        %v909 = vxor.u32 %v881, 2147516416
        %v910 = vxor.u32 %v882, 2147516416
        %v911 = vxor.u32 %v883, 2147516416
        %v912 = vxor.u32 %v884, 2147516416
        %v913 = vxor.u32 %v885, 2147516416
        %v914 = vxor.u32 %v886, 2147516416
        %v915 = vxor.u32 %v887, 2147516416
        %v916 = vxor.u32 %v888, 2147516416
        %v917 = vxor.u32 %v889, 2147516416
        %v918 = vxor.u32 %v890, 2147516416
        %v919 = vxor.u32 %v891, 2147516416
        %v920 = vxor.u32 %v892, 2147516416
        %v922 = vmul.bf16 %v893, 1069105081
        %v923 = vpow.bf16.pop %v922
        %v925 = vmul.bf16 %v894, 1069105081
        %v926 = vpow.bf16.pop %v925
        %v928 = vmul.bf16 %v895, 1069105081
        %v929 = vpow.bf16.pop %v928
        %v931 = vmul.bf16 %v896, 1069105081
        %v932 = vpow.bf16.pop %v931
        %v934 = vmul.bf16 %v897, 1069105081
        %v935 = vpow.bf16.pop %v934
        %v937 = vmul.bf16 %v898, 1069105081
        %v938 = vpow.bf16.pop %v937
        %v940 = vmul.bf16 %v899, 1069105081
        %v941 = vpow.bf16.pop %v940
        %v943 = vmul.bf16 %v900, 1069105081
        %v944 = vpow.bf16.pop %v943
        %v946 = vmul.bf16 %v901, 1069105081
        %v947 = vpow.bf16.pop %v946
        %v949 = vmul.bf16 %v902, 1069105081
        %v950 = vpow.bf16.pop %v949
        %v952 = vmul.bf16 %v903, 1069105081
        %v953 = vpow.bf16.pop %v952
        %v955 = vmul.bf16 %v904, 1069105081
        %v956 = vpow.bf16.pop %v955
        %v958 = vmul.bf16 %v905, 1069105081
        %v959 = vpow.bf16.pop %v958
        %v961 = vmul.bf16 %v906, 1069105081
        %v962 = vpow.bf16.pop %v961
        %v964 = vmul.bf16 %v907, 1069105081
        %v965 = vpow.bf16.pop %v964
        %v967 = vmul.bf16 %v908, 1069105081
        %v968 = vpow.bf16.pop %v967
        %v970 = vmul.bf16 %v909, 1069105081
        %v971 = vpow.bf16.pop %v970
        %v973 = vmul.bf16 %v910, 1069105081
        %v974 = vpow.bf16.pop %v973
        %v976 = vmul.bf16 %v911, 1069105081
        %v977 = vpow.bf16.pop %v976
        %v979 = vmul.bf16 %v912, 1069105081
        %v980 = vpow.bf16.pop %v979
        %v982 = vmul.bf16 %v913, 1069105081
        %v983 = vpow.bf16.pop %v982
        %v985 = vmul.bf16 %v914, 1069105081
        %v986 = vpow.bf16.pop %v985
        %v988 = vmul.bf16 %v915, 1069105081
        %v989 = vpow.bf16.pop %v988
        %v991 = vmul.bf16 %v916, 1069105081
        %v992 = vpow.bf16.pop %v991
        %v994 = vmul.bf16 %v917, 1069105081
        %v995 = vpow.bf16.pop %v994
        %v997 = vmul.bf16 %v918, 1069105081
        %v998 = vpow.bf16.pop %v997
        %v1000 = vmul.bf16 %v919, 1069105081
        %v1001 = vpow.bf16.pop %v1000
        %v1003 = vmul.bf16 %v920, 1069105081
        %v1004 = vpow.bf16.pop %v1003
        %v1005 = vadd.bf16 %v923, 1065369472
        %v1006 = vadd.bf16 %v926, 1065369472
        %v1007 = vadd.bf16 %v929, 1065369472
        %v1008 = vadd.bf16 %v932, 1065369472
        %v1009 = vadd.bf16 %v935, 1065369472
        %v1010 = vadd.bf16 %v938, 1065369472
        %v1011 = vadd.bf16 %v941, 1065369472
        %v1012 = vadd.bf16 %v944, 1065369472
        %v1013 = vadd.bf16 %v947, 1065369472
        %v1014 = vadd.bf16 %v950, 1065369472
        %v1015 = vadd.bf16 %v953, 1065369472
        %v1016 = vadd.bf16 %v956, 1065369472
        %v1017 = vadd.bf16 %v959, 1065369472
        %v1018 = vadd.bf16 %v962, 1065369472
        %v1019 = vadd.bf16 %v965, 1065369472
        %v1020 = vadd.bf16 %v968, 1065369472
        %v1021 = vadd.bf16 %v971, 1065369472
        %v1022 = vadd.bf16 %v974, 1065369472
        %v1023 = vadd.bf16 %v977, 1065369472
        %v1024 = vadd.bf16 %v980, 1065369472
        %v1025 = vadd.bf16 %v983, 1065369472
        %v1026 = vadd.bf16 %v986, 1065369472
        %v1027 = vadd.bf16 %v989, 1065369472
        %v1028 = vadd.bf16 %v992, 1065369472
        %v1029 = vadd.bf16 %v995, 1065369472
        %v1030 = vadd.bf16 %v998, 1065369472
        %v1031 = vadd.bf16 %v1001, 1065369472
        %v1032 = vadd.bf16 %v1004, 1065369472
        %v1033 = vrcp.bf16.pop %v1005
        %v1034 = vmul.bf16 1065369472, %v1033
        %v1035 = vrcp.bf16.pop %v1006
        %v1036 = vmul.bf16 1065369472, %v1035
        %v1037 = vrcp.bf16.pop %v1007
        %v1038 = vmul.bf16 1065369472, %v1037
        %v1039 = vrcp.bf16.pop %v1008
        %v1040 = vmul.bf16 1065369472, %v1039
        %v1041 = vrcp.bf16.pop %v1009
        %v1042 = vmul.bf16 1065369472, %v1041
        %v1043 = vrcp.bf16.pop %v1010
        %v1044 = vmul.bf16 1065369472, %v1043
        %v1045 = vrcp.bf16.pop %v1011
        %v1046 = vmul.bf16 1065369472, %v1045
        %v1047 = vrcp.bf16.pop %v1012
        %v1048 = vmul.bf16 1065369472, %v1047
        %v1049 = vrcp.bf16.pop %v1013
        %v1050 = vmul.bf16 1065369472, %v1049
        %v1051 = vrcp.bf16.pop %v1014
        %v1052 = vmul.bf16 1065369472, %v1051
        %v1053 = vrcp.bf16.pop %v1015
        %v1054 = vmul.bf16 1065369472, %v1053
        %v1055 = vrcp.bf16.pop %v1016
        %v1056 = vmul.bf16 1065369472, %v1055
        %v1057 = vrcp.bf16.pop %v1017
        %v1058 = vmul.bf16 1065369472, %v1057
        %v1059 = vrcp.bf16.pop %v1018
        %v1060 = vmul.bf16 1065369472, %v1059
        %v1061 = vrcp.bf16.pop %v1019
        %v1062 = vmul.bf16 1065369472, %v1061
        %v1063 = vrcp.bf16.pop %v1020
        %v1064 = vmul.bf16 1065369472, %v1063
        %v1065 = vrcp.bf16.pop %v1021
        %v1066 = vmul.bf16 1065369472, %v1065
        %v1067 = vrcp.bf16.pop %v1022
        %v1068 = vmul.bf16 1065369472, %v1067
        %v1069 = vrcp.bf16.pop %v1023
        %v1070 = vmul.bf16 1065369472, %v1069
        %v1071 = vrcp.bf16.pop %v1024
        %v1072 = vmul.bf16 1065369472, %v1071
        %v1073 = vrcp.bf16.pop %v1025
        %v1074 = vmul.bf16 1065369472, %v1073
        %v1075 = vrcp.bf16.pop %v1026
        %v1076 = vmul.bf16 1065369472, %v1075
        %v1077 = vrcp.bf16.pop %v1027
        %v1078 = vmul.bf16 1065369472, %v1077
        %v1079 = vrcp.bf16.pop %v1028
        %v1080 = vmul.bf16 1065369472, %v1079
        %v1081 = vrcp.bf16.pop %v1029
        %v1082 = vmul.bf16 1065369472, %v1081
        %v1083 = vrcp.bf16.pop %v1030
        %v1084 = vmul.bf16 1065369472, %v1083
        %v1085 = vrcp.bf16.pop %v1031
        %v1086 = vmul.bf16 1065369472, %v1085
        %v1087 = vrcp.bf16.pop %v1032
        %v1088 = vmul.bf16 1065369472, %v1087
        %v1089 = vmul.bf16 %v865, %v1034
        %v1090 = vmul.bf16 %v866, %v1036
        %v1091 = vmul.bf16 %v867, %v1038
        %v1092 = vmul.bf16 %v868, %v1040
        %v1093 = vmul.bf16 %v869, %v1042
        %v1094 = vmul.bf16 %v870, %v1044
        %v1095 = vmul.bf16 %v871, %v1046
        %v1096 = vmul.bf16 %v872, %v1048
        %v1097 = vmul.bf16 %v873, %v1050
        %v1098 = vmul.bf16 %v874, %v1052
        %v1099 = vmul.bf16 %v875, %v1054
        %v1100 = vmul.bf16 %v876, %v1056
        %v1101 = vmul.bf16 %v877, %v1058
        %v1102 = vmul.bf16 %v878, %v1060
        %v1103 = vmul.bf16 %v879, %v1062
        %v1104 = vmul.bf16 %v880, %v1064
        %v1105 = vmul.bf16 %v881, %v1066
        %v1106 = vmul.bf16 %v882, %v1068
        %v1107 = vmul.bf16 %v883, %v1070
        %v1108 = vmul.bf16 %v884, %v1072
        %v1109 = vmul.bf16 %v885, %v1074
        %v1110 = vmul.bf16 %v886, %v1076
        %v1111 = vmul.bf16 %v887, %v1078
        %v1112 = vmul.bf16 %v888, %v1080
        %v1113 = vmul.bf16 %v889, %v1082
        %v1114 = vmul.bf16 %v890, %v1084
        %v1115 = vmul.bf16 %v891, %v1086
        %v1116 = vmul.bf16 %v892, %v1088
        %v1117 = vld [vmem:[#allocation5] sm:$0xf]
        %v1118 = vld [vmem:[#allocation5 + $0x4] sm:$0xf]
        %v1119 = vld [vmem:[#allocation5 + $0x8] sm:$0xf]
        %v1120 = vld [vmem:[#allocation5 + $0xc] sm:$0xf]
        %v1121 = vld [vmem:[#allocation5 + $0x10] sm:$0xf]
        %v1122 = vld [vmem:[#allocation5 + $0x14] sm:$0xf]
        %v1123 = vld [vmem:[#allocation5 + $0x18] sm:$0xf]
        %v1124 = vld [vmem:[#allocation5 + $0x1c] sm:$0xf]
        %v1125 = vld [vmem:[#allocation5 + $0x20] sm:$0xf]
        %v1126 = vld [vmem:[#allocation5 + $0x24] sm:$0xf]
        %v1127 = vld [vmem:[#allocation5 + $0x28] sm:$0xf]
        %v1128 = vld [vmem:[#allocation5 + $0x2c] sm:$0xf]
        %v1129 = vld [vmem:[#allocation5 + $0x30] sm:$0xf]
        %v1130 = vld [vmem:[#allocation5 + $0x34] sm:$0xf]
        %v1131 = vld [vmem:[#allocation5 + $0x38] sm:$0xf]
        %v1132 = vld [vmem:[#allocation5 + $0x3c] sm:$0xf]
        %v1133 = vld [vmem:[#allocation5 + $0x40] sm:$0xf]
        %v1134 = vld [vmem:[#allocation5 + $0x44] sm:$0xf]
        %v1135 = vld [vmem:[#allocation5 + $0x48] sm:$0xf]
        %v1136 = vld [vmem:[#allocation5 + $0x4c] sm:$0xf]
        %v1137 = vld [vmem:[#allocation5 + $0x50] sm:$0xf]
        %v1138 = vld [vmem:[#allocation5 + $0x54] sm:$0xf]
        %v1139 = vld [vmem:[#allocation5 + $0x58] sm:$0xf]
        %v1140 = vld [vmem:[#allocation5 + $0x5c] sm:$0xf]
        %v1141 = vld [vmem:[#allocation5 + $0x60] sm:$0xf]
        %v1142 = vld [vmem:[#allocation5 + $0x64] sm:$0xf]
        %v1143 = vld [vmem:[#allocation5 + $0x68] sm:$0xf]
        %v1144 = vld [vmem:[#allocation5 + $0x6c] sm:$0xf]
        %v1145 = vld [vmem:[#allocation5 + $0x70] sm:$0xf]
        %v1146 = vld [vmem:[#allocation5 + $0x74] sm:$0xf]
        %v1147 = vld [vmem:[#allocation5 + $0x78] sm:$0xf]
        %v1148 = vld [vmem:[#allocation5 + $0x7c] sm:$0xf]
        %v1149 = vld [vmem:[#allocation5 + $0x80] sm:$0xf]
        %v1150 = vld [vmem:[#allocation5 + $0x84] sm:$0xf]
        %v1151 = vld [vmem:[#allocation5 + $0x88] sm:$0xf]
        %v1152 = vld [vmem:[#allocation5 + $0x8c] sm:$0xf]
        %v1153 = vld [vmem:[#allocation5 + $0x90] sm:$0xf]
        %v1154 = vld [vmem:[#allocation5 + $0x94] sm:$0xf]
        %v1155 = vld [vmem:[#allocation5 + $0x98] sm:$0xf]
        %v1156 = vld [vmem:[#allocation5 + $0x9c] sm:$0xf]
        %v1157 = vld [vmem:[#allocation5 + $0xa0] sm:$0xf]
        %v1158 = vld [vmem:[#allocation5 + $0xa4] sm:$0xf]
        %v1159 = vld [vmem:[#allocation5 + $0xa8] sm:$0xf]
        %v1160 = vld [vmem:[#allocation5 + $0xac] sm:$0xf]
        %v1161 = vld [vmem:[#allocation5 + $0xb0] sm:$0xf]
        %v1162 = vld [vmem:[#allocation5 + $0xb4] sm:$0xf]
        %v1163 = vld [vmem:[#allocation5 + $0xb8] sm:$0xf]
        %v1164 = vld [vmem:[#allocation5 + $0xbc] sm:$0xf]
        %v1165 = vld [vmem:[#allocation5 + $0xc0] sm:$0xf]
        %v1166 = vld [vmem:[#allocation5 + $0xc4] sm:$0xf]
        %v1167 = vld [vmem:[#allocation5 + $0xc8] sm:$0xf]
        %v1168 = vld [vmem:[#allocation5 + $0xcc] sm:$0xf]
        %v1169 = vld [vmem:[#allocation5 + $0xd0] sm:$0xf]
        %v1170 = vld [vmem:[#allocation5 + $0xd4] sm:$0xf]
        %v1171 = vld [vmem:[#allocation5 + $0xd8] sm:$0xf]
        %v1172 = vld [vmem:[#allocation5 + $0xdc] sm:$0xf]
        %v1173 = vld [vmem:[#allocation5 + $0xe0] sm:$0xf]
        %v1174 = vld [vmem:[#allocation5 + $0xe4] sm:$0xf]
        %v1175 = vld [vmem:[#allocation5 + $0xe8] sm:$0xf]
        %v1176 = vld [vmem:[#allocation5 + $0xec] sm:$0xf]
        %v1177 = vld [vmem:[#allocation5 + $0xf0] sm:$0xf]
        %v1178 = vld [vmem:[#allocation5 + $0xf4] sm:$0xf]
        %v1179 = vld [vmem:[#allocation5 + $0xf8] sm:$0xf]
        %v1180 = vld [vmem:[#allocation5 + $0xfc] sm:$0xf]
        %v1181 = vld [vmem:[%s4] sm:$0x1]
        %v1183 = vlaneseq
        %v1184 = vshrl.u32 %v1183, 7
        %v1185 = vsub.s32 0, %v1184
        %v1186 = vrot.slane %v1181, %v1185
        %v1252 = vunpack.c.l.b16 %v1117
        %v1253 = vunpack.c.l.b16 %v1118
        %v1254 = vunpack.c.l.b16 %v1119
        %v1255 = vunpack.c.l.b16 %v1120
        %v1256 = vunpack.c.l.b16 %v1121
        %v1257 = vunpack.c.l.b16 %v1122
        %v1258 = vunpack.c.l.b16 %v1123
        %v1259 = vunpack.c.l.b16 %v1124
        %v1260 = vunpack.c.l.b16 %v1125
        %v1261 = vunpack.c.l.b16 %v1126
        %v1262 = vunpack.c.l.b16 %v1127
        %v1263 = vunpack.c.l.b16 %v1128
        %v1264 = vunpack.c.l.b16 %v1129
        %v1265 = vunpack.c.l.b16 %v1130
        %v1266 = vunpack.c.l.b16 %v1131
        %v1267 = vunpack.c.l.b16 %v1132
        %v1268 = vunpack.c.l.b16 %v1133
        %v1269 = vunpack.c.l.b16 %v1134
        %v1270 = vunpack.c.l.b16 %v1135
        %v1271 = vunpack.c.l.b16 %v1136
        %v1272 = vunpack.c.l.b16 %v1137
        %v1273 = vunpack.c.l.b16 %v1138
        %v1274 = vunpack.c.l.b16 %v1139
        %v1275 = vunpack.c.l.b16 %v1140
        %v1276 = vunpack.c.l.b16 %v1141
        %v1277 = vunpack.c.l.b16 %v1142
        %v1278 = vunpack.c.l.b16 %v1143
        %v1279 = vunpack.c.l.b16 %v1144
        %v1280 = vunpack.c.l.b16 %v1145
        %v1281 = vunpack.c.l.b16 %v1146
        %v1282 = vunpack.c.l.b16 %v1147
        %v1283 = vunpack.c.l.b16 %v1148
        %v1284 = vunpack.c.l.b16 %v1149
        %v1285 = vunpack.c.l.b16 %v1150
        %v1286 = vunpack.c.l.b16 %v1151
        %v1287 = vunpack.c.l.b16 %v1152
        %v1288 = vunpack.c.l.b16 %v1153
        %v1289 = vunpack.c.l.b16 %v1154
        %v1290 = vunpack.c.l.b16 %v1155
        %v1291 = vunpack.c.l.b16 %v1156
        %v1292 = vunpack.c.l.b16 %v1157
        %v1293 = vunpack.c.l.b16 %v1158
        %v1294 = vunpack.c.l.b16 %v1159
        %v1295 = vunpack.c.l.b16 %v1160
        %v1296 = vunpack.c.l.b16 %v1161
        %v1297 = vunpack.c.l.b16 %v1162
        %v1298 = vunpack.c.l.b16 %v1163
        %v1299 = vunpack.c.l.b16 %v1164
        %v1300 = vunpack.c.l.b16 %v1165
        %v1301 = vunpack.c.l.b16 %v1166
        %v1302 = vunpack.c.l.b16 %v1167
        %v1303 = vunpack.c.l.b16 %v1168
        %v1304 = vunpack.c.l.b16 %v1169
        %v1305 = vunpack.c.l.b16 %v1170
        %v1306 = vunpack.c.l.b16 %v1171
        %v1307 = vunpack.c.l.b16 %v1172
        %v1308 = vunpack.c.l.b16 %v1173
        %v1309 = vunpack.c.l.b16 %v1174
        %v1310 = vunpack.c.l.b16 %v1175
        %v1311 = vunpack.c.l.b16 %v1176
        %v1312 = vunpack.c.l.b16 %v1177
        %v1313 = vunpack.c.l.b16 %v1178
        %v1314 = vunpack.c.l.b16 %v1179
        %v1315 = vunpack.c.l.b16 %v1180
        %v1316 = vpack.c.b16 %v1253, %v1252
        %v1317 = vpack.c.b16 %v1255, %v1254
        %v1318 = vpack.c.b16 %v1257, %v1256
        %v1319 = vpack.c.b16 %v1259, %v1258
        %v1320 = vpack.c.b16 %v1261, %v1260
        %v1321 = vpack.c.b16 %v1263, %v1262
        %v1322 = vpack.c.b16 %v1265, %v1264
        %v1323 = vpack.c.b16 %v1267, %v1266
        %v1324 = vpack.c.b16 %v1269, %v1268
        %v1325 = vpack.c.b16 %v1271, %v1270
        %v1326 = vpack.c.b16 %v1273, %v1272
        %v1327 = vpack.c.b16 %v1275, %v1274
        %v1328 = vpack.c.b16 %v1277, %v1276
        %v1329 = vpack.c.b16 %v1279, %v1278
        %v1330 = vpack.c.b16 %v1281, %v1280
        %v1331 = vpack.c.b16 %v1283, %v1282
        %v1332 = vpack.c.b16 %v1285, %v1284
        %v1333 = vpack.c.b16 %v1287, %v1286
        %v1334 = vpack.c.b16 %v1289, %v1288
        %v1335 = vpack.c.b16 %v1291, %v1290
        %v1336 = vpack.c.b16 %v1293, %v1292
        %v1337 = vpack.c.b16 %v1295, %v1294
        %v1338 = vpack.c.b16 %v1297, %v1296
        %v1339 = vpack.c.b16 %v1299, %v1298
        %v1340 = vpack.c.b16 %v1301, %v1300
        %v1341 = vpack.c.b16 %v1303, %v1302
        %v1342 = vpack.c.b16 %v1305, %v1304
        %v1343 = vpack.c.b16 %v1307, %v1306
        %v1344 = vpack.c.b16 %v1309, %v1308
        %v1345 = vpack.c.b16 %v1311, %v1310
        %v1346 = vpack.c.b16 %v1313, %v1312
        %v1347 = vpack.c.b16 %v1315, %v1314
        %1380 = vmatprep.subr.bf16.mxu0 0
        %1381 = vmatpush1.bf16.msra.mxu0 %v1316
        %1382 = vmatprep.subr.bf16.mxu0 0
        %1383 = vmatpush1.bf16.msra.mxu0 %v1317
        %1384 = vmatprep.subr.bf16.mxu0 0
        %1385 = vmatpush1.bf16.msra.mxu0 %v1318
        %1386 = vmatprep.subr.bf16.mxu0 0
        %1387 = vmatpush1.bf16.msra.mxu0 %v1319
        %1388 = vmatprep.subr.bf16.mxu0 0
        %1389 = vmatpush1.bf16.msra.mxu0 %v1320
        %1390 = vmatprep.subr.bf16.mxu0 0
        %1391 = vmatpush1.bf16.msra.mxu0 %v1321
        %1392 = vmatprep.subr.bf16.mxu0 0
        %1393 = vmatpush1.bf16.msra.mxu0 %v1322
        %1394 = vmatprep.subr.bf16.mxu0 0
        %1395 = vmatpush1.bf16.msra.mxu0 %v1323
        %1396 = vmatprep.subr.bf16.mxu0 0
        %1397 = vmatpush1.bf16.msra.mxu0 %v1324
        %1398 = vmatprep.subr.bf16.mxu0 0
        %1399 = vmatpush1.bf16.msra.mxu0 %v1325
        %1400 = vmatprep.subr.bf16.mxu0 0
        %1401 = vmatpush1.bf16.msra.mxu0 %v1326
        %1402 = vmatprep.subr.bf16.mxu0 0
        %1403 = vmatpush1.bf16.msra.mxu0 %v1327
        %1404 = vmatprep.subr.bf16.mxu0 0
        %1405 = vmatpush1.bf16.msra.mxu0 %v1328
        %1406 = vmatprep.subr.bf16.mxu0 0
        %1407 = vmatpush1.bf16.msra.mxu0 %v1329
        %1408 = vmatprep.subr.bf16.mxu0 0
        %1409 = vmatpush1.bf16.msra.mxu0 %v1330
        %1410 = vmatprep.subr.bf16.mxu0 0
        %1411 = vmatpush1.bf16.msra.mxu0 %v1331
        %1412 = vmatprep.mubr.bf16.mxu0 %v1090
        %1413 = vmatmul.mubr.bf16.gmra.mrb[0].mxu0 %v1089
        %v1414 = vpop.f32.mrb[0].mxu0
        %v1415 = vadd.f32 %v1186, %v1414
        %v1416 = vpop.f32.mrb[0].mxu0
        %v1417 = vpop.f32.mrb[0].mxu0
        %v1418 = vadd.f32 %v1186, %v1417
        %v1419 = vpop.f32.mrb[0].mxu0
        %1420 = vmatprep.mubr.bf16.mxu0 %v1094
        %1421 = vmatmul.mubr.bf16.gmra.mrb[0].mxu0 %v1093
        %v1422 = vpop.f32.mrb[0].mxu0
        %v1423 = vadd.f32 %v1186, %v1422
        %v1424 = vpop.f32.mrb[0].mxu0
        %v1425 = vpop.f32.mrb[0].mxu0
        %v1426 = vadd.f32 %v1186, %v1425
        %v1427 = vpop.f32.mrb[0].mxu0
        %1428 = vmatprep.mubr.bf16.mxu0 %v1098
        %1429 = vmatmul.mubr.bf16.gmra.mrb[0].mxu0 %v1097
        %v1430 = vpop.f32.mrb[0].mxu0
        %v1431 = vadd.f32 %v1186, %v1430
        %v1432 = vpop.f32.mrb[0].mxu0
        %v1433 = vpop.f32.mrb[0].mxu0
        %v1434 = vadd.f32 %v1186, %v1433
        %v1435 = vpop.f32.mrb[0].mxu0
        %1436 = vmatprep.mubr.bf16.mxu0 %v1102
        %1437 = vmatmul.mubr.bf16.gmra.mrb[0].mxu0 %v1101
        %v1438 = vpop.f32.mrb[0].mxu0
        %v1439 = vadd.f32 %v1186, %v1438
        %v1440 = vpop.f32.mrb[0].mxu0
        %v1441 = vpop.f32.mrb[0].mxu0
        %v1442 = vadd.f32 %v1186, %v1441
        %v1443 = vpop.f32.mrb[0].mxu0
        %1444 = vmatprep.mubr.bf16.mxu0 %v1106
        %1445 = vmatmul.mubr.bf16.gmra.mrb[0].mxu0 %v1105
        %v1446 = vpop.f32.mrb[0].mxu0
        %v1447 = vadd.f32 %v1186, %v1446
        %v1448 = vpop.f32.mrb[0].mxu0
        %v1449 = vpop.f32.mrb[0].mxu0
        %v1450 = vadd.f32 %v1186, %v1449
        %v1451 = vpop.f32.mrb[0].mxu0
        %1452 = vmatprep.mubr.bf16.mxu0 %v1110
        %1453 = vmatmul.mubr.bf16.gmra.mrb[0].mxu0 %v1109
        %v1454 = vpop.f32.mrb[0].mxu0
        %v1455 = vadd.f32 %v1186, %v1454
        %v1456 = vpop.f32.mrb[0].mxu0
        %v1457 = vpop.f32.mrb[0].mxu0
        %v1458 = vadd.f32 %v1186, %v1457
        %v1459 = vpop.f32.mrb[0].mxu0
        %1460 = vmatprep.mubr.bf16.mxu0 %v1114
        %1461 = vmatmul.mubr.bf16.gmra.mrb[0].mxu0 %v1113
        %v1462 = vpop.f32.mrb[0].mxu0
        %v1463 = vadd.f32 %v1186, %v1462
        %v1464 = vpop.f32.mrb[0].mxu0
        %v1465 = vpop.f32.mrb[0].mxu0
        %v1466 = vpop.f32.mrb[0].mxu0
        %1467 = vdwg.mxu0
        %1468 = vmatprep.subr.bf16.mxu0 0
        %1469 = vmatpush1.bf16.msra.mxu0 %v1332
        %1470 = vmatprep.subr.bf16.mxu0 0
        %1471 = vmatpush1.bf16.msra.mxu0 %v1333
        %1472 = vmatprep.subr.bf16.mxu0 0
        %1473 = vmatpush1.bf16.msra.mxu0 %v1334
        %1474 = vmatprep.subr.bf16.mxu0 0
        %1475 = vmatpush1.bf16.msra.mxu0 %v1335
        %1476 = vmatprep.subr.bf16.mxu0 0
        %1477 = vmatpush1.bf16.msra.mxu0 %v1336
        %1478 = vmatprep.subr.bf16.mxu0 0
        %1479 = vmatpush1.bf16.msra.mxu0 %v1337
        %1480 = vmatprep.subr.bf16.mxu0 0
        %1481 = vmatpush1.bf16.msra.mxu0 %v1338
        %1482 = vmatprep.subr.bf16.mxu0 0
        %1483 = vmatpush1.bf16.msra.mxu0 %v1339
        %1484 = vmatprep.subr.bf16.mxu0 0
        %1485 = vmatpush1.bf16.msra.mxu0 %v1340
        %1486 = vmatprep.subr.bf16.mxu0 0
        %1487 = vmatpush1.bf16.msra.mxu0 %v1341
        %1488 = vmatprep.subr.bf16.mxu0 0
        %1489 = vmatpush1.bf16.msra.mxu0 %v1342
        %1490 = vmatprep.subr.bf16.mxu0 0
        %1491 = vmatpush1.bf16.msra.mxu0 %v1343
        %1492 = vmatprep.subr.bf16.mxu0 0
        %1493 = vmatpush1.bf16.msra.mxu0 %v1344
        %1494 = vmatprep.subr.bf16.mxu0 0
        %1495 = vmatpush1.bf16.msra.mxu0 %v1345
        %1496 = vmatprep.subr.bf16.mxu0 0
        %1497 = vmatpush1.bf16.msra.mxu0 %v1346
        %1498 = vmatprep.subr.bf16.mxu0 0
        %1499 = vmatpush1.bf16.msra.mxu0 %v1347
        %1500 = vmatprep.mubr.bf16.mxu0 %v1092
        %1501 = vmatmul.mubr.bf16.gmra.mrb[0].mxu0 %v1091
        %v1502 = vpop.f32.mrb[0].mxu0
        %v1503 = vadd.f32 %v1415, %v1502
        %v1504 = vpop.f32.mrb[0].mxu0
        %v1505 = vpop.f32.mrb[0].mxu0
        %v1506 = vadd.f32 %v1418, %v1505
        %v1507 = vpop.f32.mrb[0].mxu0
        %1508 = vmatprep.mubr.bf16.mxu0 %v1096
        %1509 = vmatmul.mubr.bf16.gmra.mrb[0].mxu0 %v1095
        %v1510 = vpop.f32.mrb[0].mxu0
        %v1511 = vadd.f32 %v1423, %v1510
        %v1512 = vpop.f32.mrb[0].mxu0
        %v1513 = vpop.f32.mrb[0].mxu0
        %v1514 = vadd.f32 %v1426, %v1513
        %v1515 = vpop.f32.mrb[0].mxu0
        %1516 = vmatprep.mubr.bf16.mxu0 %v1100
        %1517 = vmatmul.mubr.bf16.gmra.mrb[0].mxu0 %v1099
        %v1518 = vpop.f32.mrb[0].mxu0
        %v1519 = vadd.f32 %v1431, %v1518
        %v1520 = vpop.f32.mrb[0].mxu0
        %v1521 = vpop.f32.mrb[0].mxu0
        %v1522 = vadd.f32 %v1434, %v1521
        %v1523 = vpop.f32.mrb[0].mxu0
        %1524 = vmatprep.mubr.bf16.mxu0 %v1104
        %1525 = vmatmul.mubr.bf16.gmra.mrb[0].mxu0 %v1103
        %v1526 = vpop.f32.mrb[0].mxu0
        %v1527 = vadd.f32 %v1439, %v1526
        %v1528 = vpop.f32.mrb[0].mxu0
        %v1529 = vpop.f32.mrb[0].mxu0
        %v1530 = vadd.f32 %v1442, %v1529
        %v1531 = vpop.f32.mrb[0].mxu0
        %1532 = vmatprep.mubr.bf16.mxu0 %v1108
        %1533 = vmatmul.mubr.bf16.gmra.mrb[0].mxu0 %v1107
        %v1534 = vpop.f32.mrb[0].mxu0
        %v1535 = vadd.f32 %v1447, %v1534
        %v1536 = vpop.f32.mrb[0].mxu0
        %v1537 = vpop.f32.mrb[0].mxu0
        %v1538 = vadd.f32 %v1450, %v1537
        %v1539 = vpop.f32.mrb[0].mxu0
        %1540 = vmatprep.mubr.bf16.mxu0 %v1112
        %1541 = vmatmul.mubr.bf16.gmra.mrb[0].mxu0 %v1111
        %v1542 = vpop.f32.mrb[0].mxu0
        %v1543 = vadd.f32 %v1455, %v1542
        %v1544 = vpop.f32.mrb[0].mxu0
        %v1545 = vpop.f32.mrb[0].mxu0
        %v1546 = vadd.f32 %v1458, %v1545
        %v1547 = vpop.f32.mrb[0].mxu0
        %1548 = vmatprep.mubr.bf16.mxu0 %v1116
        %1549 = vmatmul.mubr.bf16.gmra.mrb[0].mxu0 %v1115
        %v1550 = vpop.f32.mrb[0].mxu0
        %v1551 = vadd.f32 %v1463, %v1550
        %v1552 = vpop.f32.mrb[0].mxu0
        %v1553 = vpop.f32.mrb[0].mxu0
        %v1554 = vpop.f32.mrb[0].mxu0
        %1555 = vdwg.mxu0
        %1556 = vst [vmem:[%s248] sm:$0xff] %v1503
        %1557 = vst [vmem:[%s248 + $0x8] sm:$0xff] %v1506
        %1558 = vst [vmem:[%s248 + $0x10] sm:$0xff] %v1511
        %1559 = vst [vmem:[%s248 + $0x18] sm:$0xff] %v1514
        %1560 = vst [vmem:[%s248 + $0x20] sm:$0xff] %v1519
        %1561 = vst [vmem:[%s248 + $0x28] sm:$0xff] %v1522
        %1562 = vst [vmem:[%s248 + $0x30] sm:$0xff] %v1527
        %1563 = vst [vmem:[%s248 + $0x38] sm:$0xff] %v1530
        %1564 = vst [vmem:[%s248 + $0x40] sm:$0xff] %v1535
        %1565 = vst [vmem:[%s248 + $0x48] sm:$0xff] %v1538
        %1566 = vst [vmem:[%s248 + $0x50] sm:$0xff] %v1543
        %1567 = vst [vmem:[%s248 + $0x58] sm:$0xff] %v1546
        %1568 = vst [vmem:[%s248 + $0x60] sm:$0xff] %v1551
        %s1569 = sand.u32 %s139, 1
        %s1570 = scalar_lea.sflag [#allocation4], %s1569
        %s1571 = sand.u32 %s139, 1
        %s1572 = smul.addr %s1571, 104
        %s1573 = scalar_lea.vmem [#allocation7], %s1572
        // Predicated region
        $region49: #{tpu_custom_call.1} parent=39 // pred_check
          %p1574 = pneg %p149
        $region50: #{tpu_custom_call.1} parent=39 // pred_check_branch
          %1576 = sbr.rel (%p1574) target = $region52
        $region51: #{tpu_custom_call.1} parent=39 // pred_region
          %s1577 = smul.u32 13, %s21
          %s1579 = ssub.s32 1664, 1664
          %1580 = vsyncadd %s1570, %s1579
          %s1581 = smul.addr %s1577, 128
          %s1582 = scalar_lea.hbm %s5, %s1581
          %s1583 = sshll.u32 %s1573, 4
          %s1584 = int_to_ptr.vmem [resolvable:$true] %s1583
          %1589 = dma.vmem_to_hbm [thread:$0]  %s1584, 1664, %s1582, %s1570, 128, 128, 8
        $region52: #{tpu_custom_call.1} parent=39 // pred_fallthru
          _
      $region40: #{tpu_custom_call.1} parent=5 // pred_fallthru
        _
      %p1590 = scmp.le.s32.totalorder 2, %s16
      // Predicated region
      $region53: #{tpu_custom_call.1} parent=5 // pred_check
        %p1591 = pneg %p1590
      $region54: #{tpu_custom_call.1} parent=5 // pred_check_branch
        %1593 = sbr.rel (%p1591) target = $region56
      $region55: #{tpu_custom_call.1} parent=5 // pred_region
        %s1594 = ssub.s32 %s16, 2
        // Predicated region
        $region57: #{tpu_custom_call.1} parent=55 // pred_check
          %p1595 = pneg %p155
        $region58: #{tpu_custom_call.1} parent=55 // pred_check_branch
          %1597 = sbr.rel (%p1595) target = $region60
        $region59: #{tpu_custom_call.1} parent=55 // pred_region
          %s1598 = sand.u32 %s140, 1
          %s1599 = scalar_lea.sflag [#allocation4], %s1598
          %s1600 = sand.u32 %s140, 1
          %s1601 = smul.addr %s1600, 104
          %s1602 = scalar_lea.vmem [#allocation7], %s1601
          %1603 = dma.done %s1599, 1664
        $region60: #{tpu_custom_call.1} parent=55 // pred_fallthru
          _
      $region56: #{tpu_custom_call.1} parent=5 // pred_fallthru
        _
    $region6: #{tpu_custom_call.1} parent=1 // loop_footer
      %s20 = sadd.s32 1, %s16
    $region7: #{tpu_custom_call.1} parent=1 // loop_footer_branch
      %15 = sbr.rel target = $region3
    $region8: #{tpu_custom_call.1} parent=1 // loop_exit
      _
    %1604 = vsyncpa [#allocation3], 1
    %s1605 = scalar_lea.sflag [#allocation3], 1
    %1606 = vsyncpa %s1605, 1
    %1607 = vsyncpa [#allocation6], 1
    %1608 = vsyncpa [#allocation4], 1
    %s1609 = scalar_lea.sflag [#allocation4], 1
    %1610 = vsyncpa %s1609, 1

</llo_original>
